<compile_context>
chip_gen: v5e
topology: v5e:2x2
jax: 0.10.0
libtpu: 0.0.40
codegen_flags: <defaults>
</compile_context>

<pallas_src>
import numpy as np
import jax
import jax.numpy as jnp
from jax import lax
from jax.experimental import pallas as pl
from jax.experimental.pallas import tpu as pltpu

# ---------------- config (small, consistent with the module) ----------------
MAX_SEQ_LEN = 16
D_MODEL     = 32          # decoder_hidden
N_LAYERS    = 2           # decoder_layer
N_HEAD      = 2           # decoder_head
D_K         = D_MODEL // N_HEAD
D_INNER     = 64          # conv_filter_size
KERNEL_SIZE = (9, 1)      # conv_kernel_size (FastSpeech2 default [9, 1])
K1          = KERNEL_SIZE[0]
PAD1        = (K1 - 1) // 2
LN_EPS      = 1e-5
NEG_BIG     = -1e30       # stands in for -inf in the attention mask fill
assert KERNEL_SIZE[1] == 1, "second FFN conv is assumed to be kernel-size 1"

# ---------- packed parameter slab layout (rows padded to multiples of 8) ----------
PWIDTH = 3 * D_MODEL                         # 96 lanes

def _align8(n):
    return ((n + 7) // 8) * 8

OFF_WQKV = 0                                  # (D, 3D)   fused [Wq|Wk|Wv]
OFF_BQKV = OFF_WQKV + _align8(D_MODEL)        # (1, 3D)   fused [bq|bk|bv]
OFF_WO   = OFF_BQKV + 8                       # (D, D)    output projection
OFF_VEC  = OFF_WO + _align8(D_MODEL)          # (6, D)    [bo, g1, be1, cb2, g2, be2]
OFF_CW1  = OFF_VEC + 8                        # (K1*D, D_INNER)  conv1 as im2col weight
OFF_CB1  = OFF_CW1 + _align8(K1 * D_MODEL)    # (1, D_INNER)
OFF_CW2  = OFF_CB1 + 8                        # (D_INNER, D)     conv2 (k=1) weight
ROWS_PER_LAYER = OFF_CW2 + _align8(D_INNER)   # 440 (multiple of 8)
TOTAL_ROWS = N_LAYERS * ROWS_PER_LAYER        # 880


def get_sinusoid_encoding_table(n_position, d_hid):
    """Same math as the PyTorch helper, returned as a jnp.float32 array."""
    def cal_angle(position, hid_idx):
        return position / np.power(10000, 2 * (hid_idx // 2) / d_hid)
    table = np.array([[cal_angle(pos, j) for j in range(d_hid)]
                      for pos in range(n_position)])
    table[:, 0::2] = np.sin(table[:, 0::2])
    table[:, 1::2] = np.cos(table[:, 1::2])
    return jnp.asarray(table, dtype=jnp.float32)


def _layer_norm(x, g, b):
    mu = jnp.mean(x, axis=-1, keepdims=True)
    var = jnp.mean(jnp.square(x - mu), axis=-1, keepdims=True)
    return (x - mu) * lax.rsqrt(var + LN_EPS) * g + b


# ------------------------------ Pallas kernel -------------------------------
def aux_decoder_kernel(lens_ref, x_ref, pos_ref, params_ref, out_ref):
    b = pl.program_id(0)
    n = lens_ref[b]                       # valid length of this batch row (SMEM scalar)
    S = x_ref.shape[1]
    D = x_ref.shape[2]
    scale = 1.0 / float(np.sqrt(D_K))

    # Positional encoding fused into the kernel (saves a separate XLA pass over x).
    x = x_ref[0] + pos_ref[...]                                        # (S, D)

    # Masks built once per batch row from the prefetched length, hoisted out of
    # the layer / head loops and reused everywhere.
    row_idx = lax.broadcasted_iota(jnp.int32, (S, 1), 0)
    keep_q = (row_idx < n).astype(jnp.float32)                         # (S, 1)  1 = valid
    col_idx = lax.broadcasted_iota(jnp.int32, (S, S), 1)
    mask_bias = jnp.where(col_idx >= n, NEG_BIG, 0.0).astype(jnp.float32)  # (S, S)

    for l in range(N_LAYERS):             # both FFT blocks inside one kernel launch
        base = l * ROWS_PER_LAYER
        w_qkv = params_ref[base + OFF_WQKV: base + OFF_WQKV + D, 0:3 * D]       # (D, 3D)
        b_qkv = params_ref[base + OFF_BQKV: base + OFF_BQKV + 1, 0:3 * D]       # (1, 3D)
        w_o   = params_ref[base + OFF_WO:   base + OFF_WO + D, 0:D]             # (D, D)
        vecs  = params_ref[base + OFF_VEC:  base + OFF_VEC + 6, 0:D]            # (6, D)
        b_o  = vecs[0:1, :]
        g1   = vecs[1:2, :]
        be1  = vecs[2:3, :]
        cb2  = vecs[3:4, :]
        g2   = vecs[4:5, :]
        be2  = vecs[5:6, :]
        cw1  = params_ref[base + OFF_CW1: base + OFF_CW1 + K1 * D, 0:D_INNER]   # (K1*D, Dh)
        cb1  = params_ref[base + OFF_CB1: base + OFF_CB1 + 1, 0:D_INNER]        # (1, Dh)
        cw2  = params_ref[base + OFF_CW2: base + OFF_CW2 + D_INNER, 0:D]        # (Dh, D)

        # ---- multi-head self-attention (fused QKV + fused output projection) ----
        residual = x
        qkv = jnp.dot(x, w_qkv, preferred_element_type=jnp.float32) + b_qkv     # (S, 3D)
        ctx = []
        for h in range(N_HEAD):           # tiny static loop; per-head score/ctx matmuls
            q = qkv[:, h * D_K:(h + 1) * D_K]
            k = qkv[:, D + h * D_K: D + (h + 1) * D_K]
            v = qkv[:, 2 * D + h * D_K: 2 * D + (h + 1) * D_K]
            scores = lax.dot_general(q, k, (((1,), (1,)), ((), ())),
                                     preferred_element_type=jnp.float32) * scale
            scores = scores + mask_bias                   # masked_fill(mask, -inf)
            m = jnp.max(scores, axis=-1, keepdims=True)
            p = jnp.exp(scores - m)
            denom = jnp.sum(p, axis=-1, keepdims=True)
            attn = p * pl.reciprocal(denom, approx=True)  # softmax over keys (EUP recip)
            ctx.append(jnp.dot(attn, v, preferred_element_type=jnp.float32))    # (S, dk)
        ctx = jnp.concatenate(ctx, axis=1)                                       # (S, D)
        proj = jnp.dot(ctx, w_o, preferred_element_type=jnp.float32) + b_o
        y = _layer_norm(proj + residual, g1, be1)
        y = y * keep_q                                    # masked_fill(mask, 0)

        # ---- position-wise FFN: Conv1d(K1, pad) -> ReLU -> Conv1d(1), im2col ----
        res2 = y
        zpad = jnp.zeros((PAD1, D), jnp.float32)
        ypad = jnp.concatenate([zpad, y, zpad], axis=0)                          # (S+K1-1, D)
        # im2col slab kept in registers; cols[:, t*D + c] = ypad[s + t, c] = y[s + t - PAD1, c]
        cols = jnp.concatenate([ypad[t:t + S, :] for t in range(K1)], axis=1)    # (S, K1*D)
        hidden = jnp.dot(cols, cw1, preferred_element_type=jnp.float32) + cb1    # one MXU op
        hidden = jnp.maximum(hidden, 0.0)
        ff = jnp.dot(hidden, cw2, preferred_element_type=jnp.float32) + cb2      # k=1 conv
        x = _layer_norm(ff + res2, g2, be2) * keep_q      # masked_fill(mask, 0)

    out_ref[0] = x


# ------------------------------ wrapper --------------------------------------
def aux_decoder(enc_seq, mask_bool, pos_table, params_slab):
    """enc_seq: (B, S, D) f32; mask_bool: (B, S) bool, True = padded (right padding)."""
    B, S0, D = enc_seq.shape
    S = min(S0, MAX_SEQ_LEN)              # eval path with S <= max_seq_len
    x = enc_seq[:, :S, :]
    mask = mask_bool[:, :S]
    # length-style padding mask -> per-batch valid length, scalar-prefetched to SMEM
    lengths = jnp.sum(jnp.logical_not(mask), axis=1).astype(jnp.int32)           # (B,)
    pos = pos_table[:S, :]

    grid_spec = pltpu.PrefetchScalarGridSpec(
        num_scalar_prefetch=1,
        grid=(B,),
        in_specs=[
            pl.BlockSpec((1, S, D), lambda b, lens: (b, 0, 0)),                  # x row
            pl.BlockSpec((S, D), lambda b, lens: (0, 0)),                        # pos table
            pl.BlockSpec((TOTAL_ROWS, PWIDTH), lambda b, lens: (0, 0)),          # packed params
        ],
        out_specs=pl.BlockSpec((1, S, D), lambda b, lens: (b, 0, 0)),
    )
    out = pl.pallas_call(
        aux_decoder_kernel,
        out_shape=jax.ShapeDtypeStruct((B, S, D), jnp.float32),
        grid_spec=grid_spec,
        compiler_params=pltpu.CompilerParams(
            dimension_semantics=("parallel",)),   # batch rows shard across v7x TCs
    )(lengths, x, pos, params_slab)
    return out, mask


# ------------------------------ parameter init / packing ---------------------
def init_layer_params(key):
    ks = jax.random.split(key, 12)
    nrm = lambda k, shape: jax.random.normal(k, shape, jnp.float32) * 0.02
    return dict(
        wq=nrm(ks[0], (D_MODEL, D_MODEL)), bq=nrm(ks[1], (D_MODEL,)),
        wk=nrm(ks[2], (D_MODEL, D_MODEL)), bk=nrm(ks[3], (D_MODEL,)),
        wv=nrm(ks[4], (D_MODEL, D_MODEL)), bv=nrm(ks[5], (D_MODEL,)),
        wo=nrm(ks[6], (D_MODEL, D_MODEL)), bo=nrm(ks[7], (D_MODEL,)),
        g1=jnp.ones((D_MODEL,), jnp.float32), be1=jnp.zeros((D_MODEL,), jnp.float32),
        # cw1[t, c_in, c_out] == PyTorch Conv1d weight.permute(2, 1, 0)
        cw1=nrm(ks[8], (K1, D_MODEL, D_INNER)), cb1=nrm(ks[9], (D_INNER,)),
        # cw2[c_in, c_out] == PyTorch Conv1d(k=1) weight[:, :, 0].T
        cw2=nrm(ks[10], (D_INNER, D_MODEL)), cb2=nrm(ks[11], (D_MODEL,)),
        g2=jnp.ones((D_MODEL,), jnp.float32), be2=jnp.zeros((D_MODEL,), jnp.float32),
    )


def pack_layer_params(p):
    """Pack one layer's 16 tensors into a (ROWS_PER_LAYER, PWIDTH) f32 block."""
    blk = jnp.zeros((ROWS_PER_LAYER, PWIDTH), jnp.float32)
    wqkv = jnp.concatenate([p["wq"], p["wk"], p["wv"]], axis=1)          # (D, 3D)
    bqkv = jnp.concatenate([p["bq"], p["bk"], p["bv"]], axis=0)          # (3D,)
    blk = blk.at[OFF_WQKV:OFF_WQKV + D_MODEL, :3 * D_MODEL].set(wqkv)
    blk = blk.at[OFF_BQKV, :3 * D_MODEL].set(bqkv)
    blk = blk.at[OFF_WO:OFF_WO + D_MODEL, :D_MODEL].set(p["wo"])
    vec = jnp.stack([p["bo"], p["g1"], p["be1"], p["cb2"], p["g2"], p["be2"]], axis=0)
    blk = blk.at[OFF_VEC:OFF_VEC + 6, :D_MODEL].set(vec)
    blk = blk.at[OFF_CW1:OFF_CW1 + K1 * D_MODEL, :D_INNER].set(
        p["cw1"].reshape(K1 * D_MODEL, D_INNER))                         # row t*D + c_in
    blk = blk.at[OFF_CB1, :D_INNER].set(p["cb1"])
    blk = blk.at[OFF_CW2:OFF_CW2 + D_INNER, :D_MODEL].set(p["cw2"])
    return blk


if __name__ == "__main__":
    key = jax.random.PRNGKey(0)
    B, S = 2, 8

    k_in, k_par = jax.random.split(key)
    enc_seq = jax.random.normal(k_in, (B, S, D_MODEL), jnp.float32)
    lengths = jnp.array([S, S - 2], dtype=jnp.int32)
    mask = jnp.arange(S)[None, :] >= lengths[:, None]          # True = padded

    # position_enc = sinusoid table for n_position = max_seq_len + 1
    pos_table = get_sinusoid_encoding_table(MAX_SEQ_LEN + 1, D_MODEL)

    layer_keys = jax.random.split(k_par, N_LAYERS)
    params_slab = jnp.concatenate(
        [pack_layer_params(init_layer_params(k)) for k in layer_keys], axis=0)
    assert params_slab.shape == (TOTAL_ROWS, PWIDTH)

    dec_out, out_mask = aux_decoder(enc_seq, mask, pos_table, params_slab)
    dec_out = jax.block_until_ready(dec_out)

    assert dec_out.shape == (B, S, D_MODEL)
    assert bool(jnp.all(jnp.isfinite(dec_out)))
    # padded positions must be exactly zero (masked_fill semantics)
    assert bool(jnp.all(jnp.where(out_mask[:, :, None], dec_out == 0.0, True)))
    print("KERNEL_OK")
</pallas_src>

<mosaic_0001>
module attributes {stable_mosaic.version = 11 : i64} {
  func.func @aux_decoder_kernel(%arg0: i32, %arg1: memref<2xi32, #tpu.memory_space<smem>>, %arg2: memref<1x8x32xf32, #tpu.memory_space<vmem>>, %arg3: memref<8x32xf32, #tpu.memory_space<vmem>>, %arg4: memref<880x96xf32, #tpu.memory_space<vmem>>, %arg5: memref<1x8x32xf32, #tpu.memory_space<vmem>>) attributes {dimension_semantics = [#tpu.dimension_semantics<parallel>], iteration_bounds = array<i64: 2>, scalar_prefetch = 1 : i64, scratch_operands = 0 : i64, tpu.core_type = #tpu.core_type<tc>, window_params = [{transform_indices = @transform_0, window_bounds = array<i64: 1, 8, 32>}, {pipeline_mode = #tpu.pipeline_mode<synchronous>, transform_indices = @transform_1, window_bounds = array<i64: 8, 32>}, {pipeline_mode = #tpu.pipeline_mode<synchronous>, transform_indices = @transform_2, window_bounds = array<i64: 880, 96>}, {transform_indices = @transform_3, window_bounds = array<i64: 1, 8, 32>}]} {
    %0 = arith.index_cast %arg0 : i32 to index
    %1 = memref.load %arg1[%0] : memref<2xi32, #tpu.memory_space<smem>>
    %c0 = arith.constant 0 : index
    %c0_0 = arith.constant 0 : index
    %c0_1 = arith.constant 0 : index
    %2 = vector.load %arg2[%c0, %c0_0, %c0_1] : memref<1x8x32xf32, #tpu.memory_space<vmem>>, vector<1x8x32xf32>
    %3 = vector.shape_cast %2 : vector<1x8x32xf32> to vector<8x32xf32>
    %c0_2 = arith.constant 0 : index
    %c0_3 = arith.constant 0 : index
    %4 = vector.load %arg3[%c0_2, %c0_3] : memref<8x32xf32, #tpu.memory_space<vmem>>, vector<8x32xf32>
    %5 = arith.addf %3, %4 : vector<8x32xf32>
    %6 = tpu.iota {dimensions = array<i32: 0>} : vector<8x1xi32>
    %7 = vector.broadcast %1 : i32 to vector<8x1xi32>
    %8 = arith.cmpi slt, %6, %7 : vector<8x1xi32>
    %9 = arith.extui %8 : vector<8x1xi1> to vector<8x1xi32>
    %10 = arith.sitofp %9 : vector<8x1xi32> to vector<8x1xf32>
    %11 = tpu.iota {dimensions = array<i32: 1>} : vector<8x8xi32>
    %12 = vector.broadcast %1 : i32 to vector<8x8xi32>
    %13 = arith.cmpi sge, %11, %12 : vector<8x8xi32>
    %cst = arith.constant -1.000000e+30 : f32
    %cst_4 = arith.constant 0.000000e+00 : f32
    %14 = vector.broadcast %cst : f32 to vector<8x8xf32>
    %15 = vector.broadcast %cst_4 : f32 to vector<8x8xf32>
    %16 = arith.select %13, %14, %15 : vector<8x8xi1>, vector<8x8xf32>
    %c0_5 = arith.constant 0 : index
    %c0_6 = arith.constant 0 : index
    %17 = vector.load %arg4[%c0_5, %c0_6] : memref<880x96xf32, #tpu.memory_space<vmem>>, vector<32x96xf32>
    %c32 = arith.constant 32 : index
    %c0_7 = arith.constant 0 : index
    %18 = vector.load %arg4[%c32, %c0_7] : memref<880x96xf32, #tpu.memory_space<vmem>>, vector<1x96xf32>
    %c40 = arith.constant 40 : index
    %c0_8 = arith.constant 0 : index
    %19 = vector.load %arg4[%c40, %c0_8] : memref<880x96xf32, #tpu.memory_space<vmem>>, vector<32x32xf32>
    %c72 = arith.constant 72 : index
    %c0_9 = arith.constant 0 : index
    %20 = vector.load %arg4[%c72, %c0_9] : memref<880x96xf32, #tpu.memory_space<vmem>>, vector<6x32xf32>
    %21 = vector.extract_strided_slice %20 {offsets = [0, 0], sizes = [1, 32], strides = [1, 1]} : vector<6x32xf32> to vector<1x32xf32>
    %22 = vector.extract_strided_slice %20 {offsets = [1, 0], sizes = [1, 32], strides = [1, 1]} : vector<6x32xf32> to vector<1x32xf32>
    %23 = vector.extract_strided_slice %20 {offsets = [2, 0], sizes = [1, 32], strides = [1, 1]} : vector<6x32xf32> to vector<1x32xf32>
    %24 = vector.extract_strided_slice %20 {offsets = [3, 0], sizes = [1, 32], strides = [1, 1]} : vector<6x32xf32> to vector<1x32xf32>
    %25 = vector.extract_strided_slice %20 {offsets = [4, 0], sizes = [1, 32], strides = [1, 1]} : vector<6x32xf32> to vector<1x32xf32>
    %26 = vector.extract_strided_slice %20 {offsets = [5, 0], sizes = [1, 32], strides = [1, 1]} : vector<6x32xf32> to vector<1x32xf32>
    %c80 = arith.constant 80 : index
    %c0_10 = arith.constant 0 : index
    %27 = vector.load %arg4[%c80, %c0_10] : memref<880x96xf32, #tpu.memory_space<vmem>>, vector<288x64xf32>
    %c368 = arith.constant 368 : index
    %c0_11 = arith.constant 0 : index
    %28 = vector.load %arg4[%c368, %c0_11] : memref<880x96xf32, #tpu.memory_space<vmem>>, vector<1x64xf32>
    %c376 = arith.constant 376 : index
    %c0_12 = arith.constant 0 : index
    %29 = vector.load %arg4[%c376, %c0_12] : memref<880x96xf32, #tpu.memory_space<vmem>>, vector<64x32xf32>
    %cst_13 = arith.constant dense<0.000000e+00> : vector<8x96xf32>
    %30 = tpu.matmul %5, %17, %cst_13 {dimension_numbers = #tpu.dot_dimension_numbers<[1], [0], [0], [1], [0, 0, 1, 1], [], []>} : vector<8x32xf32>, vector<32x96xf32>, vector<8x96xf32> -> vector<8x96xf32>
    %31 = vector.broadcast %18 : vector<1x96xf32> to vector<8x96xf32>
    %32 = arith.addf %30, %31 : vector<8x96xf32>
    %33 = vector.extract_strided_slice %32 {offsets = [0, 0], sizes = [8, 16], strides = [1, 1]} : vector<8x96xf32> to vector<8x16xf32>
    %34 = vector.extract_strided_slice %32 {offsets = [0, 32], sizes = [8, 16], strides = [1, 1]} : vector<8x96xf32> to vector<8x16xf32>
    %35 = vector.extract_strided_slice %32 {offsets = [0, 64], sizes = [8, 16], strides = [1, 1]} : vector<8x96xf32> to vector<8x16xf32>
    %cst_14 = arith.constant dense<0.000000e+00> : vector<8x8xf32>
    %36 = tpu.matmul %33, %34, %cst_14 {dimension_numbers = #tpu.dot_dimension_numbers<[1], [1], [0], [0], [0, 0, 1, 0], [], []>} : vector<8x16xf32>, vector<8x16xf32>, vector<8x8xf32> -> vector<8x8xf32>
    %cst_15 = arith.constant 2.500000e-01 : f32
    %37 = vector.broadcast %cst_15 : f32 to vector<8x8xf32>
    %38 = arith.mulf %36, %37 : vector<8x8xf32>
    %39 = arith.addf %38, %16 : vector<8x8xf32>
    %cst_16 = arith.constant dense<0xFF800000> : vector<8xf32>
    %40 = vector.multi_reduction <maximumf>, %39, %cst_16 [1] : vector<8x8xf32> to vector<8xf32>
    %41 = vector.shape_cast %40 : vector<8xf32> to vector<8x1xf32>
    %42 = vector.broadcast %41 : vector<8x1xf32> to vector<8x8xf32>
    %43 = arith.subf %39, %42 : vector<8x8xf32>
    %44 = math.exp %43 : vector<8x8xf32>
    %cst_17 = arith.constant dense<0.000000e+00> : vector<8xf32>
    %45 = vector.multi_reduction <add>, %44, %cst_17 [1] : vector<8x8xf32> to vector<8xf32>
    %46 = vector.shape_cast %45 : vector<8xf32> to vector<8x1xf32>
    %47 = tpu.reciprocal %46 {approx = true} : vector<8x1xf32> -> vector<8x1xf32>
    %48 = vector.broadcast %47 : vector<8x1xf32> to vector<8x8xf32>
    %49 = arith.mulf %44, %48 : vector<8x8xf32>
    %cst_18 = arith.constant dense<0.000000e+00> : vector<8x16xf32>
    %50 = tpu.matmul %49, %35, %cst_18 {dimension_numbers = #tpu.dot_dimension_numbers<[1], [0], [0], [1], [0, 0, 1, 1], [], []>} : vector<8x8xf32>, vector<8x16xf32>, vector<8x16xf32> -> vector<8x16xf32>
    %51 = vector.extract_strided_slice %32 {offsets = [0, 16], sizes = [8, 16], strides = [1, 1]} : vector<8x96xf32> to vector<8x16xf32>
    %52 = vector.extract_strided_slice %32 {offsets = [0, 48], sizes = [8, 16], strides = [1, 1]} : vector<8x96xf32> to vector<8x16xf32>
    %53 = vector.extract_strided_slice %32 {offsets = [0, 80], sizes = [8, 16], strides = [1, 1]} : vector<8x96xf32> to vector<8x16xf32>
    %cst_19 = arith.constant dense<0.000000e+00> : vector<8x8xf32>
    %54 = tpu.matmul %51, %52, %cst_19 {dimension_numbers = #tpu.dot_dimension_numbers<[1], [1], [0], [0], [0, 0, 1, 0], [], []>} : vector<8x16xf32>, vector<8x16xf32>, vector<8x8xf32> -> vector<8x8xf32>
    %cst_20 = arith.constant 2.500000e-01 : f32
    %55 = vector.broadcast %cst_20 : f32 to vector<8x8xf32>
    %56 = arith.mulf %54, %55 : vector<8x8xf32>
    %57 = arith.addf %56, %16 : vector<8x8xf32>
    %cst_21 = arith.constant dense<0xFF800000> : vector<8xf32>
    %58 = vector.multi_reduction <maximumf>, %57, %cst_21 [1] : vector<8x8xf32> to vector<8xf32>
    %59 = vector.shape_cast %58 : vector<8xf32> to vector<8x1xf32>
    %60 = vector.broadcast %59 : vector<8x1xf32> to vector<8x8xf32>
    %61 = arith.subf %57, %60 : vector<8x8xf32>
    %62 = math.exp %61 : vector<8x8xf32>
    %cst_22 = arith.constant dense<0.000000e+00> : vector<8xf32>
    %63 = vector.multi_reduction <add>, %62, %cst_22 [1] : vector<8x8xf32> to vector<8xf32>
    %64 = vector.shape_cast %63 : vector<8xf32> to vector<8x1xf32>
    %65 = tpu.reciprocal %64 {approx = true} : vector<8x1xf32> -> vector<8x1xf32>
    %66 = vector.broadcast %65 : vector<8x1xf32> to vector<8x8xf32>
    %67 = arith.mulf %62, %66 : vector<8x8xf32>
    %cst_23 = arith.constant dense<0.000000e+00> : vector<8x16xf32>
    %68 = tpu.matmul %67, %53, %cst_23 {dimension_numbers = #tpu.dot_dimension_numbers<[1], [0], [0], [1], [0, 0, 1, 1], [], []>} : vector<8x8xf32>, vector<8x16xf32>, vector<8x16xf32> -> vector<8x16xf32>
    %69 = tpu.concatenate %50, %68 in 1 : vector<8x16xf32>, vector<8x16xf32> -> vector<8x32xf32>
    %cst_24 = arith.constant dense<0.000000e+00> : vector<8x32xf32>
    %70 = tpu.matmul %69, %19, %cst_24 {dimension_numbers = #tpu.dot_dimension_numbers<[1], [0], [0], [1], [0, 0, 1, 1], [], []>} : vector<8x32xf32>, vector<32x32xf32>, vector<8x32xf32> -> vector<8x32xf32>
    %71 = vector.broadcast %21 : vector<1x32xf32> to vector<8x32xf32>
    %72 = arith.addf %70, %71 : vector<8x32xf32>
    %73 = arith.addf %72, %5 : vector<8x32xf32>
    %cst_25 = arith.constant dense<0.000000e+00> : vector<8xf32>
    %74 = vector.multi_reduction <add>, %73, %cst_25 [1] : vector<8x32xf32> to vector<8xf32>
    %75 = vector.shape_cast %74 : vector<8xf32> to vector<8x1xf32>
    %cst_26 = arith.constant 3.200000e+01 : f32
    %76 = vector.broadcast %cst_26 : f32 to vector<8x1xf32>
    %77 = arith.divf %75, %76 : vector<8x1xf32>
    %78 = vector.broadcast %77 : vector<8x1xf32> to vector<8x32xf32>
    %79 = arith.subf %73, %78 : vector<8x32xf32>
    %80 = arith.mulf %79, %79 : vector<8x32xf32>
    %cst_27 = arith.constant dense<0.000000e+00> : vector<8xf32>
    %81 = vector.multi_reduction <add>, %80, %cst_27 [1] : vector<8x32xf32> to vector<8xf32>
    %82 = vector.shape_cast %81 : vector<8xf32> to vector<8x1xf32>
    %cst_28 = arith.constant 3.200000e+01 : f32
    %83 = vector.broadcast %cst_28 : f32 to vector<8x1xf32>
    %84 = arith.divf %82, %83 : vector<8x1xf32>
    %85 = vector.broadcast %77 : vector<8x1xf32> to vector<8x32xf32>
    %86 = arith.subf %73, %85 : vector<8x32xf32>
    %cst_29 = arith.constant 9.99999974E-6 : f32
    %87 = vector.broadcast %cst_29 : f32 to vector<8x1xf32>
    %88 = arith.addf %84, %87 : vector<8x1xf32>
    %89 = math.rsqrt %88 : vector<8x1xf32>
    %90 = vector.broadcast %89 : vector<8x1xf32> to vector<8x32xf32>
    %91 = arith.mulf %86, %90 : vector<8x32xf32>
    %92 = vector.broadcast %22 : vector<1x32xf32> to vector<8x32xf32>
    %93 = arith.mulf %91, %92 : vector<8x32xf32>
    %94 = vector.broadcast %23 : vector<1x32xf32> to vector<8x32xf32>
    %95 = arith.addf %93, %94 : vector<8x32xf32>
    %96 = vector.broadcast %10 : vector<8x1xf32> to vector<8x32xf32>
    %97 = arith.mulf %95, %96 : vector<8x32xf32>
    %cst_30 = arith.constant 0.000000e+00 : f32
    %98 = vector.broadcast %cst_30 : f32 to vector<4x32xf32>
    %99 = tpu.concatenate %98, %97, %98 in 0 : vector<4x32xf32>, vector<8x32xf32>, vector<4x32xf32> -> vector<16x32xf32>
    %100 = vector.extract_strided_slice %99 {offsets = [0, 0], sizes = [8, 32], strides = [1, 1]} : vector<16x32xf32> to vector<8x32xf32>
    %101 = vector.extract_strided_slice %99 {offsets = [1, 0], sizes = [8, 32], strides = [1, 1]} : vector<16x32xf32> to vector<8x32xf32>
    %102 = vector.extract_strided_slice %99 {offsets = [2, 0], sizes = [8, 32], strides = [1, 1]} : vector<16x32xf32> to vector<8x32xf32>
    %103 = vector.extract_strided_slice %99 {offsets = [3, 0], sizes = [8, 32], strides = [1, 1]} : vector<16x32xf32> to vector<8x32xf32>
    %104 = vector.extract_strided_slice %99 {offsets = [4, 0], sizes = [8, 32], strides = [1, 1]} : vector<16x32xf32> to vector<8x32xf32>
    %105 = vector.extract_strided_slice %99 {offsets = [5, 0], sizes = [8, 32], strides = [1, 1]} : vector<16x32xf32> to vector<8x32xf32>
    %106 = vector.extract_strided_slice %99 {offsets = [6, 0], sizes = [8, 32], strides = [1, 1]} : vector<16x32xf32> to vector<8x32xf32>
    %107 = vector.extract_strided_slice %99 {offsets = [7, 0], sizes = [8, 32], strides = [1, 1]} : vector<16x32xf32> to vector<8x32xf32>
    %108 = vector.extract_strided_slice %99 {offsets = [8, 0], sizes = [8, 32], strides = [1, 1]} : vector<16x32xf32> to vector<8x32xf32>
    %109 = tpu.concatenate %100, %101, %102, %103, %104, %105, %106, %107, %108 in 1 : vector<8x32xf32>, vector<8x32xf32>, vector<8x32xf32>, vector<8x32xf32>, vector<8x32xf32>, vector<8x32xf32>, vector<8x32xf32>, vector<8x32xf32>, vector<8x32xf32> -> vector<8x288xf32>
    %cst_31 = arith.constant dense<0.000000e+00> : vector<8x64xf32>
    %110 = tpu.matmul %109, %27, %cst_31 {dimension_numbers = #tpu.dot_dimension_numbers<[1], [0], [0], [1], [0, 0, 1, 1], [], []>} : vector<8x288xf32>, vector<288x64xf32>, vector<8x64xf32> -> vector<8x64xf32>
    %111 = vector.broadcast %28 : vector<1x64xf32> to vector<8x64xf32>
    %112 = arith.addf %110, %111 : vector<8x64xf32>
    %cst_32 = arith.constant 0.000000e+00 : f32
    %113 = vector.broadcast %cst_32 : f32 to vector<8x64xf32>
    %114 = arith.maximumf %112, %113 : vector<8x64xf32>
    %cst_33 = arith.constant dense<0.000000e+00> : vector<8x32xf32>
    %115 = tpu.matmul %114, %29, %cst_33 {dimension_numbers = #tpu.dot_dimension_numbers<[1], [0], [0], [1], [0, 0, 1, 1], [], []>} : vector<8x64xf32>, vector<64x32xf32>, vector<8x32xf32> -> vector<8x32xf32>
    %116 = vector.broadcast %24 : vector<1x32xf32> to vector<8x32xf32>
    %117 = arith.addf %115, %116 : vector<8x32xf32>
    %118 = arith.addf %117, %97 : vector<8x32xf32>
    %cst_34 = arith.constant dense<0.000000e+00> : vector<8xf32>
    %119 = vector.multi_reduction <add>, %118, %cst_34 [1] : vector<8x32xf32> to vector<8xf32>
    %120 = vector.shape_cast %119 : vector<8xf32> to vector<8x1xf32>
    %cst_35 = arith.constant 3.200000e+01 : f32
    %121 = vector.broadcast %cst_35 : f32 to vector<8x1xf32>
    %122 = arith.divf %120, %121 : vector<8x1xf32>
    %123 = vector.broadcast %122 : vector<8x1xf32> to vector<8x32xf32>
    %124 = arith.subf %118, %123 : vector<8x32xf32>
    %125 = arith.mulf %124, %124 : vector<8x32xf32>
    %cst_36 = arith.constant dense<0.000000e+00> : vector<8xf32>
    %126 = vector.multi_reduction <add>, %125, %cst_36 [1] : vector<8x32xf32> to vector<8xf32>
    %127 = vector.shape_cast %126 : vector<8xf32> to vector<8x1xf32>
    %cst_37 = arith.constant 3.200000e+01 : f32
    %128 = vector.broadcast %cst_37 : f32 to vector<8x1xf32>
    %129 = arith.divf %127, %128 : vector<8x1xf32>
    %130 = vector.broadcast %122 : vector<8x1xf32> to vector<8x32xf32>
    %131 = arith.subf %118, %130 : vector<8x32xf32>
    %cst_38 = arith.constant 9.99999974E-6 : f32
    %132 = vector.broadcast %cst_38 : f32 to vector<8x1xf32>
    %133 = arith.addf %129, %132 : vector<8x1xf32>
    %134 = math.rsqrt %133 : vector<8x1xf32>
    %135 = vector.broadcast %134 : vector<8x1xf32> to vector<8x32xf32>
    %136 = arith.mulf %131, %135 : vector<8x32xf32>
    %137 = vector.broadcast %25 : vector<1x32xf32> to vector<8x32xf32>
    %138 = arith.mulf %136, %137 : vector<8x32xf32>
    %139 = vector.broadcast %26 : vector<1x32xf32> to vector<8x32xf32>
    %140 = arith.addf %138, %139 : vector<8x32xf32>
    %141 = vector.broadcast %10 : vector<8x1xf32> to vector<8x32xf32>
    %142 = arith.mulf %140, %141 : vector<8x32xf32>
    %c440 = arith.constant 440 : index
    %c0_39 = arith.constant 0 : index
    %143 = vector.load %arg4[%c440, %c0_39] : memref<880x96xf32, #tpu.memory_space<vmem>>, vector<32x96xf32>
    %c472 = arith.constant 472 : index
    %c0_40 = arith.constant 0 : index
    %144 = vector.load %arg4[%c472, %c0_40] : memref<880x96xf32, #tpu.memory_space<vmem>>, vector<1x96xf32>
    %c480 = arith.constant 480 : index
    %c0_41 = arith.constant 0 : index
    %145 = vector.load %arg4[%c480, %c0_41] : memref<880x96xf32, #tpu.memory_space<vmem>>, vector<32x32xf32>
    %c512 = arith.constant 512 : index
    %c0_42 = arith.constant 0 : index
    %146 = vector.load %arg4[%c512, %c0_42] : memref<880x96xf32, #tpu.memory_space<vmem>>, vector<6x32xf32>
    %147 = vector.extract_strided_slice %146 {offsets = [0, 0], sizes = [1, 32], strides = [1, 1]} : vector<6x32xf32> to vector<1x32xf32>
    %148 = vector.extract_strided_slice %146 {offsets = [1, 0], sizes = [1, 32], strides = [1, 1]} : vector<6x32xf32> to vector<1x32xf32>
    %149 = vector.extract_strided_slice %146 {offsets = [2, 0], sizes = [1, 32], strides = [1, 1]} : vector<6x32xf32> to vector<1x32xf32>
    %150 = vector.extract_strided_slice %146 {offsets = [3, 0], sizes = [1, 32], strides = [1, 1]} : vector<6x32xf32> to vector<1x32xf32>
    %151 = vector.extract_strided_slice %146 {offsets = [4, 0], sizes = [1, 32], strides = [1, 1]} : vector<6x32xf32> to vector<1x32xf32>
    %152 = vector.extract_strided_slice %146 {offsets = [5, 0], sizes = [1, 32], strides = [1, 1]} : vector<6x32xf32> to vector<1x32xf32>
    %c520 = arith.constant 520 : index
    %c0_43 = arith.constant 0 : index
    %153 = vector.load %arg4[%c520, %c0_43] : memref<880x96xf32, #tpu.memory_space<vmem>>, vector<288x64xf32>
    %c808 = arith.constant 808 : index
    %c0_44 = arith.constant 0 : index
    %154 = vector.load %arg4[%c808, %c0_44] : memref<880x96xf32, #tpu.memory_space<vmem>>, vector<1x64xf32>
    %c816 = arith.constant 816 : index
    %c0_45 = arith.constant 0 : index
    %155 = vector.load %arg4[%c816, %c0_45] : memref<880x96xf32, #tpu.memory_space<vmem>>, vector<64x32xf32>
    %cst_46 = arith.constant dense<0.000000e+00> : vector<8x96xf32>
    %156 = tpu.matmul %142, %143, %cst_46 {dimension_numbers = #tpu.dot_dimension_numbers<[1], [0], [0], [1], [0, 0, 1, 1], [], []>} : vector<8x32xf32>, vector<32x96xf32>, vector<8x96xf32> -> vector<8x96xf32>
    %157 = vector.broadcast %144 : vector<1x96xf32> to vector<8x96xf32>
    %158 = arith.addf %156, %157 : vector<8x96xf32>
    %159 = vector.extract_strided_slice %158 {offsets = [0, 0], sizes = [8, 16], strides = [1, 1]} : vector<8x96xf32> to vector<8x16xf32>
    %160 = vector.extract_strided_slice %158 {offsets = [0, 32], sizes = [8, 16], strides = [1, 1]} : vector<8x96xf32> to vector<8x16xf32>
    %161 = vector.extract_strided_slice %158 {offsets = [0, 64], sizes = [8, 16], strides = [1, 1]} : vector<8x96xf32> to vector<8x16xf32>
    %cst_47 = arith.constant dense<0.000000e+00> : vector<8x8xf32>
    %162 = tpu.matmul %159, %160, %cst_47 {dimension_numbers = #tpu.dot_dimension_numbers<[1], [1], [0], [0], [0, 0, 1, 0], [], []>} : vector<8x16xf32>, vector<8x16xf32>, vector<8x8xf32> -> vector<8x8xf32>
    %cst_48 = arith.constant 2.500000e-01 : f32
    %163 = vector.broadcast %cst_48 : f32 to vector<8x8xf32>
    %164 = arith.mulf %162, %163 : vector<8x8xf32>
    %165 = arith.addf %164, %16 : vector<8x8xf32>
    %cst_49 = arith.constant dense<0xFF800000> : vector<8xf32>
    %166 = vector.multi_reduction <maximumf>, %165, %cst_49 [1] : vector<8x8xf32> to vector<8xf32>
    %167 = vector.shape_cast %166 : vector<8xf32> to vector<8x1xf32>
    %168 = vector.broadcast %167 : vector<8x1xf32> to vector<8x8xf32>
    %169 = arith.subf %165, %168 : vector<8x8xf32>
    %170 = math.exp %169 : vector<8x8xf32>
    %cst_50 = arith.constant dense<0.000000e+00> : vector<8xf32>
    %171 = vector.multi_reduction <add>, %170, %cst_50 [1] : vector<8x8xf32> to vector<8xf32>
    %172 = vector.shape_cast %171 : vector<8xf32> to vector<8x1xf32>
    %173 = tpu.reciprocal %172 {approx = true} : vector<8x1xf32> -> vector<8x1xf32>
    %174 = vector.broadcast %173 : vector<8x1xf32> to vector<8x8xf32>
    %175 = arith.mulf %170, %174 : vector<8x8xf32>
    %cst_51 = arith.constant dense<0.000000e+00> : vector<8x16xf32>
    %176 = tpu.matmul %175, %161, %cst_51 {dimension_numbers = #tpu.dot_dimension_numbers<[1], [0], [0], [1], [0, 0, 1, 1], [], []>} : vector<8x8xf32>, vector<8x16xf32>, vector<8x16xf32> -> vector<8x16xf32>
    %177 = vector.extract_strided_slice %158 {offsets = [0, 16], sizes = [8, 16], strides = [1, 1]} : vector<8x96xf32> to vector<8x16xf32>
    %178 = vector.extract_strided_slice %158 {offsets = [0, 48], sizes = [8, 16], strides = [1, 1]} : vector<8x96xf32> to vector<8x16xf32>
    %179 = vector.extract_strided_slice %158 {offsets = [0, 80], sizes = [8, 16], strides = [1, 1]} : vector<8x96xf32> to vector<8x16xf32>
    %cst_52 = arith.constant dense<0.000000e+00> : vector<8x8xf32>
    %180 = tpu.matmul %177, %178, %cst_52 {dimension_numbers = #tpu.dot_dimension_numbers<[1], [1], [0], [0], [0, 0, 1, 0], [], []>} : vector<8x16xf32>, vector<8x16xf32>, vector<8x8xf32> -> vector<8x8xf32>
    %cst_53 = arith.constant 2.500000e-01 : f32
    %181 = vector.broadcast %cst_53 : f32 to vector<8x8xf32>
    %182 = arith.mulf %180, %181 : vector<8x8xf32>
    %183 = arith.addf %182, %16 : vector<8x8xf32>
    %cst_54 = arith.constant dense<0xFF800000> : vector<8xf32>
    %184 = vector.multi_reduction <maximumf>, %183, %cst_54 [1] : vector<8x8xf32> to vector<8xf32>
    %185 = vector.shape_cast %184 : vector<8xf32> to vector<8x1xf32>
    %186 = vector.broadcast %185 : vector<8x1xf32> to vector<8x8xf32>
    %187 = arith.subf %183, %186 : vector<8x8xf32>
    %188 = math.exp %187 : vector<8x8xf32>
    %cst_55 = arith.constant dense<0.000000e+00> : vector<8xf32>
    %189 = vector.multi_reduction <add>, %188, %cst_55 [1] : vector<8x8xf32> to vector<8xf32>
    %190 = vector.shape_cast %189 : vector<8xf32> to vector<8x1xf32>
    %191 = tpu.reciprocal %190 {approx = true} : vector<8x1xf32> -> vector<8x1xf32>
    %192 = vector.broadcast %191 : vector<8x1xf32> to vector<8x8xf32>
    %193 = arith.mulf %188, %192 : vector<8x8xf32>
    %cst_56 = arith.constant dense<0.000000e+00> : vector<8x16xf32>
    %194 = tpu.matmul %193, %179, %cst_56 {dimension_numbers = #tpu.dot_dimension_numbers<[1], [0], [0], [1], [0, 0, 1, 1], [], []>} : vector<8x8xf32>, vector<8x16xf32>, vector<8x16xf32> -> vector<8x16xf32>
    %195 = tpu.concatenate %176, %194 in 1 : vector<8x16xf32>, vector<8x16xf32> -> vector<8x32xf32>
    %cst_57 = arith.constant dense<0.000000e+00> : vector<8x32xf32>
    %196 = tpu.matmul %195, %145, %cst_57 {dimension_numbers = #tpu.dot_dimension_numbers<[1], [0], [0], [1], [0, 0, 1, 1], [], []>} : vector<8x32xf32>, vector<32x32xf32>, vector<8x32xf32> -> vector<8x32xf32>
    %197 = vector.broadcast %147 : vector<1x32xf32> to vector<8x32xf32>
    %198 = arith.addf %196, %197 : vector<8x32xf32>
    %199 = arith.addf %198, %142 : vector<8x32xf32>
    %cst_58 = arith.constant dense<0.000000e+00> : vector<8xf32>
    %200 = vector.multi_reduction <add>, %199, %cst_58 [1] : vector<8x32xf32> to vector<8xf32>
    %201 = vector.shape_cast %200 : vector<8xf32> to vector<8x1xf32>
    %cst_59 = arith.constant 3.200000e+01 : f32
    %202 = vector.broadcast %cst_59 : f32 to vector<8x1xf32>
    %203 = arith.divf %201, %202 : vector<8x1xf32>
    %204 = vector.broadcast %203 : vector<8x1xf32> to vector<8x32xf32>
    %205 = arith.subf %199, %204 : vector<8x32xf32>
    %206 = arith.mulf %205, %205 : vector<8x32xf32>
    %cst_60 = arith.constant dense<0.000000e+00> : vector<8xf32>
    %207 = vector.multi_reduction <add>, %206, %cst_60 [1] : vector<8x32xf32> to vector<8xf32>
    %208 = vector.shape_cast %207 : vector<8xf32> to vector<8x1xf32>
    %cst_61 = arith.constant 3.200000e+01 : f32
    %209 = vector.broadcast %cst_61 : f32 to vector<8x1xf32>
    %210 = arith.divf %208, %209 : vector<8x1xf32>
    %211 = vector.broadcast %203 : vector<8x1xf32> to vector<8x32xf32>
    %212 = arith.subf %199, %211 : vector<8x32xf32>
    %cst_62 = arith.constant 9.99999974E-6 : f32
    %213 = vector.broadcast %cst_62 : f32 to vector<8x1xf32>
    %214 = arith.addf %210, %213 : vector<8x1xf32>
    %215 = math.rsqrt %214 : vector<8x1xf32>
    %216 = vector.broadcast %215 : vector<8x1xf32> to vector<8x32xf32>
    %217 = arith.mulf %212, %216 : vector<8x32xf32>
    %218 = vector.broadcast %148 : vector<1x32xf32> to vector<8x32xf32>
    %219 = arith.mulf %217, %218 : vector<8x32xf32>
    %220 = vector.broadcast %149 : vector<1x32xf32> to vector<8x32xf32>
    %221 = arith.addf %219, %220 : vector<8x32xf32>
    %222 = vector.broadcast %10 : vector<8x1xf32> to vector<8x32xf32>
    %223 = arith.mulf %221, %222 : vector<8x32xf32>
    %cst_63 = arith.constant 0.000000e+00 : f32
    %224 = vector.broadcast %cst_63 : f32 to vector<4x32xf32>
    %225 = tpu.concatenate %224, %223, %224 in 0 : vector<4x32xf32>, vector<8x32xf32>, vector<4x32xf32> -> vector<16x32xf32>
    %226 = vector.extract_strided_slice %225 {offsets = [0, 0], sizes = [8, 32], strides = [1, 1]} : vector<16x32xf32> to vector<8x32xf32>
    %227 = vector.extract_strided_slice %225 {offsets = [1, 0], sizes = [8, 32], strides = [1, 1]} : vector<16x32xf32> to vector<8x32xf32>
    %228 = vector.extract_strided_slice %225 {offsets = [2, 0], sizes = [8, 32], strides = [1, 1]} : vector<16x32xf32> to vector<8x32xf32>
    %229 = vector.extract_strided_slice %225 {offsets = [3, 0], sizes = [8, 32], strides = [1, 1]} : vector<16x32xf32> to vector<8x32xf32>
    %230 = vector.extract_strided_slice %225 {offsets = [4, 0], sizes = [8, 32], strides = [1, 1]} : vector<16x32xf32> to vector<8x32xf32>
    %231 = vector.extract_strided_slice %225 {offsets = [5, 0], sizes = [8, 32], strides = [1, 1]} : vector<16x32xf32> to vector<8x32xf32>
    %232 = vector.extract_strided_slice %225 {offsets = [6, 0], sizes = [8, 32], strides = [1, 1]} : vector<16x32xf32> to vector<8x32xf32>
    %233 = vector.extract_strided_slice %225 {offsets = [7, 0], sizes = [8, 32], strides = [1, 1]} : vector<16x32xf32> to vector<8x32xf32>
    %234 = vector.extract_strided_slice %225 {offsets = [8, 0], sizes = [8, 32], strides = [1, 1]} : vector<16x32xf32> to vector<8x32xf32>
    %235 = tpu.concatenate %226, %227, %228, %229, %230, %231, %232, %233, %234 in 1 : vector<8x32xf32>, vector<8x32xf32>, vector<8x32xf32>, vector<8x32xf32>, vector<8x32xf32>, vector<8x32xf32>, vector<8x32xf32>, vector<8x32xf32>, vector<8x32xf32> -> vector<8x288xf32>
    %cst_64 = arith.constant dense<0.000000e+00> : vector<8x64xf32>
    %236 = tpu.matmul %235, %153, %cst_64 {dimension_numbers = #tpu.dot_dimension_numbers<[1], [0], [0], [1], [0, 0, 1, 1], [], []>} : vector<8x288xf32>, vector<288x64xf32>, vector<8x64xf32> -> vector<8x64xf32>
    %237 = vector.broadcast %154 : vector<1x64xf32> to vector<8x64xf32>
    %238 = arith.addf %236, %237 : vector<8x64xf32>
    %cst_65 = arith.constant 0.000000e+00 : f32
    %239 = vector.broadcast %cst_65 : f32 to vector<8x64xf32>
    %240 = arith.maximumf %238, %239 : vector<8x64xf32>
    %cst_66 = arith.constant dense<0.000000e+00> : vector<8x32xf32>
    %241 = tpu.matmul %240, %155, %cst_66 {dimension_numbers = #tpu.dot_dimension_numbers<[1], [0], [0], [1], [0, 0, 1, 1], [], []>} : vector<8x64xf32>, vector<64x32xf32>, vector<8x32xf32> -> vector<8x32xf32>
    %242 = vector.broadcast %150 : vector<1x32xf32> to vector<8x32xf32>
    %243 = arith.addf %241, %242 : vector<8x32xf32>
    %244 = arith.addf %243, %223 : vector<8x32xf32>
    %cst_67 = arith.constant dense<0.000000e+00> : vector<8xf32>
    %245 = vector.multi_reduction <add>, %244, %cst_67 [1] : vector<8x32xf32> to vector<8xf32>
    %246 = vector.shape_cast %245 : vector<8xf32> to vector<8x1xf32>
    %cst_68 = arith.constant 3.200000e+01 : f32
    %247 = vector.broadcast %cst_68 : f32 to vector<8x1xf32>
    %248 = arith.divf %246, %247 : vector<8x1xf32>
    %249 = vector.broadcast %248 : vector<8x1xf32> to vector<8x32xf32>
    %250 = arith.subf %244, %249 : vector<8x32xf32>
    %251 = arith.mulf %250, %250 : vector<8x32xf32>
    %cst_69 = arith.constant dense<0.000000e+00> : vector<8xf32>
    %252 = vector.multi_reduction <add>, %251, %cst_69 [1] : vector<8x32xf32> to vector<8xf32>
    %253 = vector.shape_cast %252 : vector<8xf32> to vector<8x1xf32>
    %cst_70 = arith.constant 3.200000e+01 : f32
    %254 = vector.broadcast %cst_70 : f32 to vector<8x1xf32>
    %255 = arith.divf %253, %254 : vector<8x1xf32>
    %256 = vector.broadcast %248 : vector<8x1xf32> to vector<8x32xf32>
    %257 = arith.subf %244, %256 : vector<8x32xf32>
    %cst_71 = arith.constant 9.99999974E-6 : f32
    %258 = vector.broadcast %cst_71 : f32 to vector<8x1xf32>
    %259 = arith.addf %255, %258 : vector<8x1xf32>
    %260 = math.rsqrt %259 : vector<8x1xf32>
    %261 = vector.broadcast %260 : vector<8x1xf32> to vector<8x32xf32>
    %262 = arith.mulf %257, %261 : vector<8x32xf32>
    %263 = vector.broadcast %151 : vector<1x32xf32> to vector<8x32xf32>
    %264 = arith.mulf %262, %263 : vector<8x32xf32>
    %265 = vector.broadcast %152 : vector<1x32xf32> to vector<8x32xf32>
    %266 = arith.addf %264, %265 : vector<8x32xf32>
    %267 = vector.broadcast %10 : vector<8x1xf32> to vector<8x32xf32>
    %268 = arith.mulf %266, %267 : vector<8x32xf32>
    %c0_72 = arith.constant 0 : index
    %c0_73 = arith.constant 0 : index
    %c0_74 = arith.constant 0 : index
    %269 = vector.load %arg5[%c0_72, %c0_73, %c0_74] : memref<1x8x32xf32, #tpu.memory_space<vmem>>, vector<1x8x32xf32>
    %270 = vector.shape_cast %269 : vector<1x8x32xf32> to vector<8x32xf32>
    %271 = vector.shape_cast %268 : vector<8x32xf32> to vector<1x8x32xf32>
    tpu.vector_store %arg5[%c0_72, %c0_73, %c0_74], %271 {strides = array<i32>} : memref<1x8x32xf32, #tpu.memory_space<vmem>>, vector<1x8x32xf32>,
    return
  }
  func.func @transform_0(%arg0: i32, %arg1: memref<2xi32, #tpu.memory_space<smem>>) -> (i32, i32, i32) {
    %c0_i32 = arith.constant 0 : i32
    %c0_i32_0 = arith.constant 0 : i32
    %c0_i32_1 = arith.constant 0 : i32
    return %arg0, %c0_i32, %c0_i32_0 : i32, i32, i32
  }
  func.func @transform_1(%arg0: i32, %arg1: memref<2xi32, #tpu.memory_space<smem>>) -> (i32, i32) {
    %c0_i32 = arith.constant 0 : i32
    %c0_i32_0 = arith.constant 0 : i32
    %c0_i32_1 = arith.constant 0 : i32
    return %c0_i32, %c0_i32_0 : i32, i32
  }
  func.func @transform_2(%arg0: i32, %arg1: memref<2xi32, #tpu.memory_space<smem>>) -> (i32, i32) {
    %c0_i32 = arith.constant 0 : i32
    %c0_i32_0 = arith.constant 0 : i32
    %c0_i32_1 = arith.constant 0 : i32
    return %c0_i32, %c0_i32_0 : i32, i32
  }
  func.func @transform_3(%arg0: i32, %arg1: memref<2xi32, #tpu.memory_space<smem>>) -> (i32, i32, i32) {
    %c0_i32 = arith.constant 0 : i32
    %c0_i32_0 = arith.constant 0 : i32
    %c0_i32_1 = arith.constant 0 : i32
    return %arg0, %c0_i32, %c0_i32_0 : i32, i32, i32
  }
}

</mosaic_0001>

<llo_original>
// kernel: tpu_custom_call.1
$region0: #{tpu_custom_call.1}
  #allocation0 [shape = 'u32[]', space=smem, size = 0x4, offset = 0x4, fixed_abs, tag = 'smem constant byte address 0x4 - core index']
  #allocation1 [shape = 'u32[72,128]{1,0:T(1,128)}', space=vmem, size = 0x9000, scoped, tag = 'internal scratch']
  #allocation2 [shape = 's32[1]{0}', space=sflag, size = 0x4, scoped, tag = 'scoped memory for tpu_custom_call.1']
  #allocation3 [shape = 'u8[512]{0}', space=smem, size = 0x200, scoped, tag = 'prefetched SMEM operand 0']
  %s0 = inlined_call_operand.vmem [shape: s32[2], index: 0, kind: input, shape index: {}]
  %s1 = inlined_call_operand.vmem [shape: f32[2,8,32], index: 1, kind: input, shape index: {}]
  %s2 = inlined_call_operand.vmem [shape: f32[8,32], index: 2, kind: input, shape index: {}]
  %s3 = inlined_call_operand.vmem [shape: f32[880,96], index: 3, kind: input, shape index: {}]
  %s4 = inlined_call_operand.hbm [shape: f32[2,8,32], index: 4, kind: output, shape index: {}]
  %s5 = sld [smem:[#allocation0]]
  $region45: #{tpu_custom_call.1} parent=0
    _
  %s7 = ssub.s32 1, %s5
  %s8 = scalar_select 0, %s7, %s5
  %s10 = sshll.u32 %s0, 4
  %s11 = int_to_ptr.vmem [resolvable:$true] %s10
  %13 = dma.vmem_to_smem %s11, 16, [#allocation3], [#allocation2]
  %15 = dma.done [#allocation2], 16
  %16 = sfence
  $region1: #{tpu_custom_call.1} parent=0
    #allocation4 [shape = 'u8[8192]{0}', space=vmem, size = 0x2000, scoped, tag = 'output window, operand 0']
    #allocation5 [shape = 's32[2]{0}', space=sflag, size = 0x8, scoped, tag = 'scoped memory for tpu_custom_call.1']
    %17 = vsyncpa [#allocation5], 0
    %s18 = scalar_lea.sflag [#allocation5], 1
    %19 = vsyncpa %s18, 0
    loop: start=0, step=1, limit=4
    $region2: #{tpu_custom_call.1} parent=1 // loop_pre_header
      _
    $region3: #{tpu_custom_call.1} parent=1 // loop_header
      %s21 = sphi 0, %s25
      %p22 = scmp.ge.s32.totalorder %s21, 4
      %s31 = sphi 0, %s33
      %s34 = sphi 0, %s31
      %s35 = sphi 0, %s34
      %s51 = sphi 0, %s35
      %s55 = sphi 0, %s55
      %s57 = sphi 0, %s55
      %s58 = sphi 0, %s57
      %s72 = sphi 0, %s58
      %s76 = sphi 0, %s76
      %s78 = sphi 0, %s76
      %s79 = sphi 0, %s78
      %s93 = sphi 0, %s79
      %s99 = sphi 0, %s101
      %s102 = sphi 0, %s99
      %s103 = sphi 0, %s102
      %s119 = sphi 0, %s103
    $region4: #{tpu_custom_call.1} parent=1 // loop_header_branch
      %24 = sbr.rel (%p22) target = $region8
    $region5: #{tpu_custom_call.1} parent=1 // loop_body
      %s26 = ssub.s32 %s21, 1
      %s27 = ssub.s32 %s21, 2
      %s28 = sadd.s32 %s21, 1
      %s29 = ssub.s32 %s21, %s28
      %p30 = scmp.eq.s32.totalorder %s29, 0
      %s32 = sadd.s32 %s31, 1
      %s33 = scalar_select %p30, %s31, %s32
      %p36 = pneg %p30
      %p37 = scmp.eq.s32.totalorder %s21, 1
      %p38 = por %p36, %p37
      %p39 = scmp.ne.s32.totalorder %s31, %s34
      %p40 = scmp.eq.s32.totalorder %s21, 0
      %p41 = por %p39, %p40
      %p42 = scmp.ne.s32.totalorder %s31, %s34
      %p43 = scmp.eq.s32.totalorder %s26, 1
      %p44 = por %p42, %p43
      %p45 = scmp.ne.s32.totalorder %s34, %s35
      %p46 = scmp.eq.s32.totalorder %s26, 0
      %p47 = por %p45, %p46
      %p48 = scmp.ne.s32.totalorder %s34, %s35
      %p49 = scmp.eq.s32.totalorder %s27, 1
      %p50 = por %p48, %p49
      %p52 = scmp.ne.s32.totalorder %s35, %s51
      %p53 = scmp.eq.s32.totalorder %s27, 0
      %p54 = por %p52, %p53
      %s56 = sadd.s32 %s55, 1
      %p59 = scmp.eq.s32.totalorder %s21, 1
      %p60 = scmp.ne.s32.totalorder %s55, %s57
      %p61 = scmp.eq.s32.totalorder %s21, 0
      %p62 = por %p60, %p61
      %p63 = scmp.ne.s32.totalorder %s55, %s57
      %p64 = scmp.eq.s32.totalorder %s26, 1
      %p65 = por %p63, %p64
      %p66 = scmp.ne.s32.totalorder %s57, %s58
      %p67 = scmp.eq.s32.totalorder %s26, 0
      %p68 = por %p66, %p67
      %p69 = scmp.ne.s32.totalorder %s57, %s58
      %p70 = scmp.eq.s32.totalorder %s27, 1
      %p71 = por %p69, %p70
      %p73 = scmp.ne.s32.totalorder %s58, %s72
      %p74 = scmp.eq.s32.totalorder %s27, 0
      %p75 = por %p73, %p74
      %s77 = sadd.s32 %s76, 1
      %p80 = scmp.eq.s32.totalorder %s21, 1
      %p81 = scmp.ne.s32.totalorder %s76, %s78
      %p82 = scmp.eq.s32.totalorder %s21, 0
      %p83 = por %p81, %p82
      %p84 = scmp.ne.s32.totalorder %s76, %s78
      %p85 = scmp.eq.s32.totalorder %s26, 1
      %p86 = por %p84, %p85
      %p87 = scmp.ne.s32.totalorder %s78, %s79
      %p88 = scmp.eq.s32.totalorder %s26, 0
      %p89 = por %p87, %p88
      %p90 = scmp.ne.s32.totalorder %s78, %s79
      %p91 = scmp.eq.s32.totalorder %s27, 1
      %p92 = por %p90, %p91
      %p94 = scmp.ne.s32.totalorder %s79, %s93
      %p95 = scmp.eq.s32.totalorder %s27, 0
      %p96 = por %p94, %p95
      %s97 = ssub.s32 %s21, %s28
      %p98 = scmp.eq.s32.totalorder %s97, 0
      %s100 = sadd.s32 %s99, 1
      %s101 = scalar_select %p98, %s99, %s100
      %p104 = pneg %p98
      %p105 = scmp.eq.s32.totalorder %s21, 1
      %p106 = por %p104, %p105
      %p107 = scmp.ne.s32.totalorder %s99, %s102
      %p108 = scmp.eq.s32.totalorder %s21, 0
      %p109 = por %p107, %p108
      %p110 = scmp.ne.s32.totalorder %s99, %s102
      %p111 = scmp.eq.s32.totalorder %s26, 1
      %p112 = por %p110, %p111
      %p113 = scmp.ne.s32.totalorder %s102, %s103
      %p114 = scmp.eq.s32.totalorder %s26, 0
      %p115 = por %p113, %p114
      %p116 = scmp.ne.s32.totalorder %s102, %s103
      %p117 = scmp.eq.s32.totalorder %s27, 1
      %p118 = por %p116, %p117
      %p120 = scmp.ne.s32.totalorder %s103, %s119
      %p121 = scmp.eq.s32.totalorder %s27, 0
      %p122 = por %p120, %p121
      %p123 = scmp.le.s32.totalorder 1, %s21
      %p124 = scmp.lt.s32.totalorder %s21, 3
      %p125 = pnand %p123, %p124
      %p126 = pneg %p125
      // Predicated region
      $region9: #{tpu_custom_call.1} parent=5 // pred_check
        _
      $region10: #{tpu_custom_call.1} parent=5 // pred_check_branch
        %128 = sbr.rel (%p125) target = $region12
      $region11: #{tpu_custom_call.1} parent=5 // pred_region
        %s129 = ssub.s32 %s21, 1
        // Predicated region
        $region13: #{tpu_custom_call.1} parent=11 // pred_check
          %p130 = pneg %p68
        $region14: #{tpu_custom_call.1} parent=11 // pred_check_branch
          %132 = sbr.rel (%p130) target = $region16
        $region15: #{tpu_custom_call.1} parent=11 // pred_region
          _
        $region16: #{tpu_custom_call.1} parent=11 // pred_fallthru
          _
        // Predicated region
        $region17: #{tpu_custom_call.1} parent=11 // pred_check
          %p133 = pneg %p89
        $region18: #{tpu_custom_call.1} parent=11 // pred_check_branch
          %135 = sbr.rel (%p133) target = $region20
        $region19: #{tpu_custom_call.1} parent=11 // pred_region
          _
        $region20: #{tpu_custom_call.1} parent=11 // pred_fallthru
          _
      $region12: #{tpu_custom_call.1} parent=5 // pred_fallthru
        _
      %p136 = scmp.lt.s32.totalorder %s21, 2
      // Predicated region
      $region21: #{tpu_custom_call.1} parent=5 // pred_check
        %p137 = pneg %p136
      $region22: #{tpu_custom_call.1} parent=5 // pred_check_branch
        %139 = sbr.rel (%p137) target = $region24
      $region23: #{tpu_custom_call.1} parent=5 // pred_region
        // Predicated region
        $region25: #{tpu_custom_call.1} parent=23 // pred_check
          %p140 = pneg %p41
        $region26: #{tpu_custom_call.1} parent=23 // pred_check_branch
          %142 = sbr.rel (%p140) target = $region28
        $region27: #{tpu_custom_call.1} parent=23 // pred_region
          %p143 = scmp.lt.s32.totalorder %s21, 1
          %s144 = scalar_select %p143, %s21, 1
          %s145 = smul.addr %s144, 8
          %s146 = scalar_lea.vmem %s1, %s145
        $region28: #{tpu_custom_call.1} parent=23 // pred_fallthru
          _
      $region24: #{tpu_custom_call.1} parent=5 // pred_fallthru
        _
      %p147 = scmp.le.s32.totalorder 1, %s21
      %p148 = scmp.lt.s32.totalorder %s21, 3
      %p149 = pnand %p147, %p148
      %p150 = pneg %p149
      // Predicated region
      $region29: #{tpu_custom_call.1} parent=5 // pred_check
        _
      $region30: #{tpu_custom_call.1} parent=5 // pred_check_branch
        %152 = sbr.rel (%p149) target = $region32
      $region31: #{tpu_custom_call.1} parent=5 // pred_region
        %s153 = ssub.s32 %s21, 1
        %p154 = scmp.lt.s32.totalorder %s26, 1
        %s155 = scalar_select %p154, %s26, 1
        %s156 = smul.addr %s155, 8
        %s157 = scalar_lea.vmem %s1, %s156
        %p158 = pneg %p47
        %p159 = pneg %p44
        %p160 = pneg %p68
        %p161 = pneg %p65
        %p162 = pneg %p89
        %p163 = pneg %p86
        %p164 = pneg %p115
        %p165 = pneg %p112
        %s166 = sand.u32 %s102, 1
        %s167 = scalar_lea.sflag [#allocation5], %s166
        %s168 = sand.u32 %s102, 1
        %s169 = smul.addr %s168, 8
        %s170 = scalar_lea.vmem [#allocation4], %s169
        %p171 = scmp.lt.s32.totalorder %s26, 1
        %s172 = scalar_select %p171, %s26, 1
        %s173 = smul.addr %s172, 8
        %s174 = scalar_lea.vmem %s1, %s173
        %s175 = sld [smem:[#allocation3 + %s26]]
        %v176 = vld [vmem:[%s174] sm:$0xff]
        %v177 = vld [vmem:[%s2] sm:$0xff]
        %v178 = vadd.f32 %v176, %v177
        %v179 = vlaneseq
        %v180 = vshrl.u32 %v179, 7
        %v181 = vstv %s175
        %vm182 = vcmp.lt.s32.totalorder %v180, %v181
        %v183 = vsel %vm182, 1, 0
        %v184 = vcvt.s32.f32 %v183
        %v185 = vlaneseq
        %v186 = vand.u32 %v185, 127
        %vm187 = vcmp.ge.s32.totalorder %v186, %v181
        %v188 = vsel %vm187, -1e+30, 0.0
        %v189 = vld [vmem:[%s3] sm:$0xff]
        %v190 = vld [vmem:[%s3 + $0x8] sm:$0xff]
        %v191 = vld [vmem:[%s3 + $0x10] sm:$0xff]
        %v192 = vld [vmem:[%s3 + $0x18] sm:$0xff]
        %v193 = vld [vmem:[%s3 + $0x20] sm:$0x1]
        %v194 = vld [vmem:[%s3 + $0x28] sm:$0xff]
        %v195 = vld [vmem:[%s3 + $0x30] sm:$0xff]
        %v196 = vld [vmem:[%s3 + $0x38] sm:$0xff]
        %v197 = vld [vmem:[%s3 + $0x40] sm:$0xff]
        %v198 = vld [vmem:[%s3 + $0x48] sm:$0x3f]
        %v199 = vld [vmem:[%s3 + $0x50] sm:$0xff]
        %v200 = vld [vmem:[%s3 + $0x58] sm:$0xff]
        %v201 = vld [vmem:[%s3 + $0x60] sm:$0xff]
        %v202 = vld [vmem:[%s3 + $0x68] sm:$0xff]
        %v203 = vld [vmem:[%s3 + $0x70] sm:$0xff]
        %v204 = vld [vmem:[%s3 + $0x78] sm:$0xff]
        %v205 = vld [vmem:[%s3 + $0x80] sm:$0xff]
        %v206 = vld [vmem:[%s3 + $0x88] sm:$0xff]
        %v207 = vld [vmem:[%s3 + $0x90] sm:$0xff]
        %v208 = vld [vmem:[%s3 + $0x98] sm:$0xff]
        %v209 = vld [vmem:[%s3 + $0xa0] sm:$0xff]
        %v210 = vld [vmem:[%s3 + $0xa8] sm:$0xff]
        %v211 = vld [vmem:[%s3 + $0xb0] sm:$0xff]
        %v212 = vld [vmem:[%s3 + $0xb8] sm:$0xff]
        %v213 = vld [vmem:[%s3 + $0xc0] sm:$0xff]
        %v214 = vld [vmem:[%s3 + $0xc8] sm:$0xff]
        %v215 = vld [vmem:[%s3 + $0xd0] sm:$0xff]
        %v216 = vld [vmem:[%s3 + $0xd8] sm:$0xff]
        %v217 = vld [vmem:[%s3 + $0xe0] sm:$0xff]
        %v218 = vld [vmem:[%s3 + $0xe8] sm:$0xff]
        %v219 = vld [vmem:[%s3 + $0xf0] sm:$0xff]
        %v220 = vld [vmem:[%s3 + $0xf8] sm:$0xff]
        %v221 = vld [vmem:[%s3 + $0x100] sm:$0xff]
        %v222 = vld [vmem:[%s3 + $0x108] sm:$0xff]
        %v223 = vld [vmem:[%s3 + $0x110] sm:$0xff]
        %v224 = vld [vmem:[%s3 + $0x118] sm:$0xff]
        %v225 = vld [vmem:[%s3 + $0x120] sm:$0xff]
        %v226 = vld [vmem:[%s3 + $0x128] sm:$0xff]
        %v227 = vld [vmem:[%s3 + $0x130] sm:$0xff]
        %v228 = vld [vmem:[%s3 + $0x138] sm:$0xff]
        %v229 = vld [vmem:[%s3 + $0x140] sm:$0xff]
        %v230 = vld [vmem:[%s3 + $0x148] sm:$0xff]
        %v231 = vld [vmem:[%s3 + $0x150] sm:$0xff]
        %v232 = vld [vmem:[%s3 + $0x158] sm:$0xff]
        %v233 = vld [vmem:[%s3 + $0x160] sm:$0xff]
        %v234 = vld [vmem:[%s3 + $0x168] sm:$0xff]
        %v235 = vld [vmem:[%s3 + $0x170] sm:$0x1]
        %v236 = vld [vmem:[%s3 + $0x178] sm:$0xff]
        %v237 = vld [vmem:[%s3 + $0x180] sm:$0xff]
        %v238 = vld [vmem:[%s3 + $0x188] sm:$0xff]
        %v239 = vld [vmem:[%s3 + $0x190] sm:$0xff]
        %v240 = vld [vmem:[%s3 + $0x198] sm:$0xff]
        %v241 = vld [vmem:[%s3 + $0x1a0] sm:$0xff]
        %v242 = vld [vmem:[%s3 + $0x1a8] sm:$0xff]
        %v243 = vld [vmem:[%s3 + $0x1b0] sm:$0xff]
        %v244 = vperm.slane %v193, 0
        %vm245 = vcmask 261120
        %v247 = vsel %vm245, %v178, 0
        %249 = vmatpush.msra.mxu0 0.0
        %250 = vmatpush.msra.mxu0 0.0
        %251 = vmatpush.msra.mxu0 0.0
        %252 = vmatpush.msra.mxu0 0.0
        %253 = vmatpush.msra.mxu0 0.0
        %254 = vmatpush.msra.mxu0 0.0
        %255 = vmatpush.msra.mxu0 0.0
        %256 = vmatpush.msra.mxu0 0.0
        %257 = vmatpush.msra.mxu0 0.0
        %258 = vmatpush.msra.mxu0 0.0
        %259 = vmatpush.msra.mxu0 0.0
        %260 = vmatpush.msra.mxu0 0.0
        %261 = vmatpush.msra.mxu0 %v192
        %262 = vmatpush.msra.mxu0 %v191
        %263 = vmatpush.msra.mxu0 %v190
        %264 = vmatpush.msra.mxu0 %v189
        %265 = vmatmul.f32.gmra.mxu0 %v247
        %v266 = vpop.f32.mrf.mxu0
        %v267 = vadd.f32 %v244, %v266
        %268 = vdwg.mxu0
        %270 = vrot.lane.b32.xlu0 %v267, 96
        %v271 = vpop.permute.xlu0 %270
        %vm272 = vcmask 130048
        %v273 = vsel %vm272, %v267, 0
        %v275 = vsel %vm272, %v271, 0
        %277 = vmatpush.xpose.msra.mxu0 0.0
        %278 = vmatpush.xpose.msra.mxu0 0.0
        %279 = vmatpush.xpose.msra.mxu0 0.0
        %280 = vmatpush.xpose.msra.mxu0 0.0
        %281 = vmatpush.xpose.msra.mxu0 0.0
        %282 = vmatpush.xpose.msra.mxu0 0.0
        %283 = vmatpush.xpose.msra.mxu0 0.0
        %284 = vmatpush.xpose.msra.mxu0 0.0
        %285 = vmatpush.xpose.msra.mxu0 0.0
        %286 = vmatpush.xpose.msra.mxu0 0.0
        %287 = vmatpush.xpose.msra.mxu0 0.0
        %288 = vmatpush.xpose.msra.mxu0 0.0
        %289 = vmatpush.xpose.msra.mxu0 0.0
        %290 = vmatpush.xpose.msra.mxu0 0.0
        %291 = vmatpush.xpose.msra.mxu0 0.0
        %292 = vmatpush.xpose.msra.mxu0 %v275
        %293 = vmatmul.f32.gmra.mxu0 %v273
        %v294 = vpop.f32.mrf.mxu0
        %v295 = vadd.f32 0.0, %v294
        %296 = vdwg.mxu0
        %v297 = vmul.f32 %v295, 0.25
        %v298 = vadd.f32 %v297, %v188
        %vm299 = vcmask 64512
        %v300 = vsel %vm299, %v298, -inf
        %301 = vmax.xlane.f32.xlu0 %v300
        %v302 = vpop.xlane.xlu0 %301
        %v303 = vsub.f32 %v298, %v302
        %v304 = vmul.f32 %v303, 1.442695
        %v305 = vpow.pop %v304
        %v306 = vsel %vm299, %v305, 0.0
        %307 = vadd.xlane.f32.xlu0 %v306
        %v308 = vpop.xlane.xlu0 %307
        %v309 = vrcp.pop %v308
        %v310 = vmul.f32 %v305, %v309
        %311 = vrot.lane.b32.xlu0 %v267, 64
        %v312 = vpop.permute.xlu0 %311
        %v315 = vsel %vm299, %v310, 0
        %317 = vmatpush.msra.mxu0 0.0
        %318 = vmatpush.msra.mxu0 0.0
        %319 = vmatpush.msra.mxu0 0.0
        %320 = vmatpush.msra.mxu0 0.0
        %321 = vmatpush.msra.mxu0 0.0
        %322 = vmatpush.msra.mxu0 0.0
        %323 = vmatpush.msra.mxu0 0.0
        %324 = vmatpush.msra.mxu0 0.0
        %325 = vmatpush.msra.mxu0 0.0
        %326 = vmatpush.msra.mxu0 0.0
        %327 = vmatpush.msra.mxu0 0.0
        %328 = vmatpush.msra.mxu0 0.0
        %329 = vmatpush.msra.mxu0 0.0
        %330 = vmatpush.msra.mxu0 0.0
        %331 = vmatpush.msra.mxu0 0.0
        %332 = vmatpush.msra.mxu0 %v312
        %333 = vmatmul.f32.gmra.mxu0 %v315
        %v334 = vpop.f32.mrf.mxu0
        %v335 = vadd.f32 0.0, %v334
        %336 = vdwg.mxu0
        %337 = vrot.lane.b32.xlu0 %v267, 112
        %v338 = vpop.permute.xlu0 %337
        %339 = vrot.lane.b32.xlu0 %v267, 80
        %v340 = vpop.permute.xlu0 %339
        %v341 = vsel %vm272, %v338, 0
        %v343 = vsel %vm272, %v340, 0
        %345 = vmatpush.xpose.msra.mxu0 0.0
        %346 = vmatpush.xpose.msra.mxu0 0.0
        %347 = vmatpush.xpose.msra.mxu0 0.0
        %348 = vmatpush.xpose.msra.mxu0 0.0
        %349 = vmatpush.xpose.msra.mxu0 0.0
        %350 = vmatpush.xpose.msra.mxu0 0.0
        %351 = vmatpush.xpose.msra.mxu0 0.0
        %352 = vmatpush.xpose.msra.mxu0 0.0
        %353 = vmatpush.xpose.msra.mxu0 0.0
        %354 = vmatpush.xpose.msra.mxu0 0.0
        %355 = vmatpush.xpose.msra.mxu0 0.0
        %356 = vmatpush.xpose.msra.mxu0 0.0
        %357 = vmatpush.xpose.msra.mxu0 0.0
        %358 = vmatpush.xpose.msra.mxu0 0.0
        %359 = vmatpush.xpose.msra.mxu0 0.0
        %360 = vmatpush.xpose.msra.mxu0 %v343
        %361 = vmatmul.f32.gmra.mxu0 %v341
        %v362 = vpop.f32.mrf.mxu0
        %v363 = vadd.f32 0.0, %v362
        %364 = vdwg.mxu0
        %v365 = vmul.f32 %v363, 0.25
        %v366 = vadd.f32 %v365, %v188
        %v367 = vsel %vm299, %v366, -inf
        %368 = vmax.xlane.f32.xlu0 %v367
        %v369 = vpop.xlane.xlu0 %368
        %v370 = vsub.f32 %v366, %v369
        %v371 = vmul.f32 %v370, 1.442695
        %v372 = vpow.pop %v371
        %v373 = vsel %vm299, %v372, 0.0
        %374 = vadd.xlane.f32.xlu0 %v373
        %v375 = vpop.xlane.xlu0 %374
        %v376 = vrcp.pop %v375
        %v377 = vmul.f32 %v372, %v376
        %378 = vrot.lane.b32.xlu0 %v267, 48
        %v379 = vpop.permute.xlu0 %378
        %v382 = vsel %vm299, %v377, 0
        %384 = vmatpush.msra.mxu0 0.0
        %385 = vmatpush.msra.mxu0 0.0
        %386 = vmatpush.msra.mxu0 0.0
        %387 = vmatpush.msra.mxu0 0.0
        %388 = vmatpush.msra.mxu0 0.0
        %389 = vmatpush.msra.mxu0 0.0
        %390 = vmatpush.msra.mxu0 0.0
        %391 = vmatpush.msra.mxu0 0.0
        %392 = vmatpush.msra.mxu0 0.0
        %393 = vmatpush.msra.mxu0 0.0
        %394 = vmatpush.msra.mxu0 0.0
        %395 = vmatpush.msra.mxu0 0.0
        %396 = vmatpush.msra.mxu0 0.0
        %397 = vmatpush.msra.mxu0 0.0
        %398 = vmatpush.msra.mxu0 0.0
        %399 = vmatpush.msra.mxu0 %v379
        %400 = vmatmul.f32.gmra.mxu0 %v382
        %v401 = vpop.f32.mrf.mxu0
        %v402 = vadd.f32 0.0, %v401
        %403 = vdwg.mxu0
        %405 = vrot.lane.b32.xlu0 %v402, 16
        %v406 = vpop.permute.xlu0 %405
        %v408 = vsel %vm272, %v335, %v406
        %v409 = vperm.slane %v198, 0
        %v411 = vsel %vm245, %v408, 0
        %413 = vmatpush.msra.mxu0 0.0
        %414 = vmatpush.msra.mxu0 0.0
        %415 = vmatpush.msra.mxu0 0.0
        %416 = vmatpush.msra.mxu0 0.0
        %417 = vmatpush.msra.mxu0 0.0
        %418 = vmatpush.msra.mxu0 0.0
        %419 = vmatpush.msra.mxu0 0.0
        %420 = vmatpush.msra.mxu0 0.0
        %421 = vmatpush.msra.mxu0 0.0
        %422 = vmatpush.msra.mxu0 0.0
        %423 = vmatpush.msra.mxu0 0.0
        %424 = vmatpush.msra.mxu0 0.0
        %425 = vmatpush.msra.mxu0 %v197
        %426 = vmatpush.msra.mxu0 %v196
        %427 = vmatpush.msra.mxu0 %v195
        %428 = vmatpush.msra.mxu0 %v194
        %429 = vmatmul.f32.gmra.mxu0 %v411
        %v430 = vpop.f32.mrf.mxu0
        %v431 = vadd.f32 %v409, %v430
        %432 = vdwg.mxu0
        %v433 = vadd.f32 %v431, %v178
        %v434 = vsel %vm245, %v433, 0.0
        %435 = vadd.xlane.f32.xlu0 %v434
        %v436 = vpop.xlane.xlu0 %435
        %v437 = vrcp.pop 32.0
        %v438 = vmul.f32 32.0, %v437
        %v439 = vsub.f32 1.0, %v438
        %v440 = vmul.f32 %v437, %v439
        %v441 = vadd.f32 %v437, %v440
        %vm442 = vweird.f32 %v437
        %v443 = vsel %vm442, %v437, %v441
        %v444 = vmul.f32 %v436, %v443
        %v445 = vsub.f32 %v433, %v444
        %v446 = vmul.f32 %v445, %v445
        %v447 = vsel %vm245, %v446, 0.0
        %448 = vadd.xlane.f32.xlu0 %v447
        %v449 = vpop.xlane.xlu0 %448
        %v450 = vmul.f32 %v449, %v443
        %v451 = vadd.f32 %v450, 1e-05
        %v452 = vrsqrt.pop %v451
        %v453 = vmul.f32 %v452, %v451
        %v454 = vmul.f32 %v453, %v452
        %v455 = vmul.f32 0.5, %v454
        %v456 = vsub.f32 1.5, %v455
        %v457 = vmul.f32 %v452, %v456
        %vm458 = vweird.f32 %v451
        %vm459 = vweird.f32 %v452
        %vm460 = vmor %vm458, %vm459
        %v461 = vsel %vm460, %v452, %v457
        %v462 = vmul.f32 %v445, %v461
        %v463 = vperm.slane %v198, 1
        %v464 = vmul.f32 %v462, %v463
        %v465 = vperm.slane %v198, 2
        %v466 = vadd.f32 %v464, %v465
        %v467 = vmul.f32 %v466, %v184
        %v469 = vrot.slane %v467, 4
        %vm471 = vcmask 1043456
        %v472 = vsel %vm471, 0.0, %v469
        %v473 = vsel %vm471, %v469, 0.0
        %vm476 = vcmask 1046528
        %v477 = vrot.slane %v472, 1
        %v478 = vrot.slane %v473, 1
        %v479 = vsel %vm476, %v477, %v478
        %480 = vrot.lane.b32.xlu0 %v479, 32
        %v481 = vpop.permute.xlu0 %480
        %vm483 = vcmask 1045504
        %v484 = vrot.slane %v472, 2
        %v485 = vrot.slane %v473, 2
        %v486 = vsel %vm483, %v484, %v485
        %487 = vrot.lane.b32.xlu0 %v486, 64
        %v488 = vpop.permute.xlu0 %487
        %vm490 = vcmask 1044480
        %v491 = vrot.slane %v472, 3
        %v492 = vrot.slane %v473, 3
        %v493 = vsel %vm490, %v491, %v492
        %494 = vrot.lane.b32.xlu0 %v493, 96
        %v495 = vpop.permute.xlu0 %494
        %v497 = vrot.slane %v472, 4
        %v498 = vrot.slane %v473, 4
        %v499 = vsel %vm471, %v497, %v498
        %vm501 = vcmask 1042432
        %v502 = vrot.slane %v472, 5
        %v503 = vrot.slane %v473, 5
        %v504 = vsel %vm501, %v502, %v503
        %505 = vrot.lane.b32.xlu0 %v504, 32
        %v506 = vpop.permute.xlu0 %505
        %vm508 = vcmask 1041408
        %v509 = vrot.slane %v472, 6
        %v510 = vrot.slane %v473, 6
        %v511 = vsel %vm508, %v509, %v510
        %512 = vrot.lane.b32.xlu0 %v511, 64
        %v513 = vpop.permute.xlu0 %512
        %vm515 = vcmask 1040384
        %v516 = vrot.slane %v472, 7
        %v517 = vrot.slane %v473, 7
        %v518 = vsel %vm515, %v516, %v517
        %519 = vrot.lane.b32.xlu0 %v518, 96
        %v520 = vpop.permute.xlu0 %519
        %v522 = vsel %vm245, %v472, %v481
        %vm523 = vcmask 523264
        %v524 = vsel %vm523, %v522, %v488
        %vm525 = vcmask 785408
        %v526 = vsel %vm525, %v524, %v495
        %v527 = vsel %vm245, %v499, %v506
        %v528 = vsel %vm523, %v527, %v513
        %v529 = vsel %vm525, %v528, %v520
        %v530 = vperm.slane %v235, 0
        %v531 = vsel %vm245, %v473, 0
        %533 = vmatpush.msra.mxu0 %v214
        %534 = vmatpush.msra.mxu0 %v213
        %535 = vmatpush.msra.mxu0 %v212
        %536 = vmatpush.msra.mxu0 %v211
        %537 = vmatpush.msra.mxu0 %v210
        %538 = vmatpush.msra.mxu0 %v209
        %539 = vmatpush.msra.mxu0 %v208
        %540 = vmatpush.msra.mxu0 %v207
        %541 = vmatpush.msra.mxu0 %v206
        %542 = vmatpush.msra.mxu0 %v205
        %543 = vmatpush.msra.mxu0 %v204
        %544 = vmatpush.msra.mxu0 %v203
        %545 = vmatpush.msra.mxu0 %v202
        %546 = vmatpush.msra.mxu0 %v201
        %547 = vmatpush.msra.mxu0 %v200
        %548 = vmatpush.msra.mxu0 %v199
        %549 = vmatmul.f32.gmra.mxu0 %v526
        %v550 = vpop.f32.mrf.mxu0
        %v551 = vadd.f32 %v530, %v550
        %552 = vdwg.mxu0
        %553 = vmatpush.msra.mxu0 %v230
        %554 = vmatpush.msra.mxu0 %v229
        %555 = vmatpush.msra.mxu0 %v228
        %556 = vmatpush.msra.mxu0 %v227
        %557 = vmatpush.msra.mxu0 %v226
        %558 = vmatpush.msra.mxu0 %v225
        %559 = vmatpush.msra.mxu0 %v224
        %560 = vmatpush.msra.mxu0 %v223
        %561 = vmatpush.msra.mxu0 %v222
        %562 = vmatpush.msra.mxu0 %v221
        %563 = vmatpush.msra.mxu0 %v220
        %564 = vmatpush.msra.mxu0 %v219
        %565 = vmatpush.msra.mxu0 %v218
        %566 = vmatpush.msra.mxu0 %v217
        %567 = vmatpush.msra.mxu0 %v216
        %568 = vmatpush.msra.mxu0 %v215
        %569 = vmatmul.f32.gmra.mxu0 %v529
        %v570 = vpop.f32.mrf.mxu0
        %v571 = vadd.f32 %v551, %v570
        %572 = vdwg.mxu0
        %573 = vmatpush.msra.mxu0 0.0
        %574 = vmatpush.msra.mxu0 0.0
        %575 = vmatpush.msra.mxu0 0.0
        %576 = vmatpush.msra.mxu0 0.0
        %577 = vmatpush.msra.mxu0 0.0
        %578 = vmatpush.msra.mxu0 0.0
        %579 = vmatpush.msra.mxu0 0.0
        %580 = vmatpush.msra.mxu0 0.0
        %581 = vmatpush.msra.mxu0 0.0
        %582 = vmatpush.msra.mxu0 0.0
        %583 = vmatpush.msra.mxu0 0.0
        %584 = vmatpush.msra.mxu0 0.0
        %585 = vmatpush.msra.mxu0 %v234
        %586 = vmatpush.msra.mxu0 %v233
        %587 = vmatpush.msra.mxu0 %v232
        %588 = vmatpush.msra.mxu0 %v231
        %589 = vmatmul.f32.gmra.mxu0 %v531
        %v590 = vpop.f32.mrf.mxu0
        %v591 = vadd.f32 %v571, %v590
        %592 = vdwg.mxu0
        %v593 = vmax.f32 %v591, 0.0
        %v594 = vperm.slane %v198, 3
        %v596 = vsel %vm523, %v593, 0
        %598 = vmatpush.msra.mxu0 0.0
        %599 = vmatpush.msra.mxu0 0.0
        %600 = vmatpush.msra.mxu0 0.0
        %601 = vmatpush.msra.mxu0 0.0
        %602 = vmatpush.msra.mxu0 0.0
        %603 = vmatpush.msra.mxu0 0.0
        %604 = vmatpush.msra.mxu0 0.0
        %605 = vmatpush.msra.mxu0 0.0
        %606 = vmatpush.msra.mxu0 %v243
        %607 = vmatpush.msra.mxu0 %v242
        %608 = vmatpush.msra.mxu0 %v241
        %609 = vmatpush.msra.mxu0 %v240
        %610 = vmatpush.msra.mxu0 %v239
        %611 = vmatpush.msra.mxu0 %v238
        %612 = vmatpush.msra.mxu0 %v237
        %613 = vmatpush.msra.mxu0 %v236
        %614 = vmatmul.f32.gmra.mxu0 %v596
        %v615 = vpop.f32.mrf.mxu0
        %v616 = vadd.f32 %v594, %v615
        %617 = vdwg.mxu0
        %v618 = vadd.f32 %v616, %v467
        %v619 = vsel %vm245, %v618, 0.0
        %620 = vadd.xlane.f32.xlu0 %v619
        %v621 = vpop.xlane.xlu0 %620
        %v622 = vmul.f32 %v621, %v443
        %v623 = vsub.f32 %v618, %v622
        %v624 = vmul.f32 %v623, %v623
        %v625 = vsel %vm245, %v624, 0.0
        %626 = vadd.xlane.f32.xlu0 %v625
        %v627 = vpop.xlane.xlu0 %626
        %v628 = vmul.f32 %v627, %v443
        %v629 = vadd.f32 %v628, 1e-05
        %v630 = vrsqrt.pop %v629
        %v631 = vmul.f32 %v630, %v629
        %v632 = vmul.f32 %v631, %v630
        %v633 = vmul.f32 0.5, %v632
        %v634 = vsub.f32 1.5, %v633
        %v635 = vmul.f32 %v630, %v634
        %vm636 = vweird.f32 %v629
        %vm637 = vweird.f32 %v630
        %vm638 = vmor %vm636, %vm637
        %v639 = vsel %vm638, %v630, %v635
        %v640 = vmul.f32 %v623, %v639
        %v641 = vperm.slane %v198, 4
        %v642 = vmul.f32 %v640, %v641
        %v643 = vperm.slane %v198, 5
        %v644 = vadd.f32 %v642, %v643
        %v645 = vmul.f32 %v644, %v184
        %v646 = vld [vmem:[%s3 + $0x1b8] sm:$0xff]
        %v647 = vld [vmem:[%s3 + $0x1c0] sm:$0xff]
        %v648 = vld [vmem:[%s3 + $0x1c8] sm:$0xff]
        %v649 = vld [vmem:[%s3 + $0x1d0] sm:$0xff]
        %v650 = vld [vmem:[%s3 + $0x1d8] sm:$0x1]
        %v651 = vld [vmem:[%s3 + $0x1e0] sm:$0xff]
        %v652 = vld [vmem:[%s3 + $0x1e8] sm:$0xff]
        %v653 = vld [vmem:[%s3 + $0x1f0] sm:$0xff]
        %v654 = vld [vmem:[%s3 + $0x1f8] sm:$0xff]
        %v655 = vld [vmem:[%s3 + $0x200] sm:$0x3f]
        %v656 = vld [vmem:[%s3 + $0x208] sm:$0xff]
        %v657 = vld [vmem:[%s3 + $0x210] sm:$0xff]
        %v658 = vld [vmem:[%s3 + $0x218] sm:$0xff]
        %v659 = vld [vmem:[%s3 + $0x220] sm:$0xff]
        %v660 = vld [vmem:[%s3 + $0x228] sm:$0xff]
        %v661 = vld [vmem:[%s3 + $0x230] sm:$0xff]
        %v662 = vld [vmem:[%s3 + $0x238] sm:$0xff]
        %v663 = vld [vmem:[%s3 + $0x240] sm:$0xff]
        %v664 = vld [vmem:[%s3 + $0x248] sm:$0xff]
        %v665 = vld [vmem:[%s3 + $0x250] sm:$0xff]
        %v666 = vld [vmem:[%s3 + $0x258] sm:$0xff]
        %v667 = vld [vmem:[%s3 + $0x260] sm:$0xff]
        %v668 = vld [vmem:[%s3 + $0x268] sm:$0xff]
        %v669 = vld [vmem:[%s3 + $0x270] sm:$0xff]
        %v670 = vld [vmem:[%s3 + $0x278] sm:$0xff]
        %v671 = vld [vmem:[%s3 + $0x280] sm:$0xff]
        %v672 = vld [vmem:[%s3 + $0x288] sm:$0xff]
        %v673 = vld [vmem:[%s3 + $0x290] sm:$0xff]
        %v674 = vld [vmem:[%s3 + $0x298] sm:$0xff]
        %v675 = vld [vmem:[%s3 + $0x2a0] sm:$0xff]
        %v676 = vld [vmem:[%s3 + $0x2a8] sm:$0xff]
        %v677 = vld [vmem:[%s3 + $0x2b0] sm:$0xff]
        %v678 = vld [vmem:[%s3 + $0x2b8] sm:$0xff]
        %v679 = vld [vmem:[%s3 + $0x2c0] sm:$0xff]
        %v680 = vld [vmem:[%s3 + $0x2c8] sm:$0xff]
        %v681 = vld [vmem:[%s3 + $0x2d0] sm:$0xff]
        %v682 = vld [vmem:[%s3 + $0x2d8] sm:$0xff]
        %v683 = vld [vmem:[%s3 + $0x2e0] sm:$0xff]
        %v684 = vld [vmem:[%s3 + $0x2e8] sm:$0xff]
        %v685 = vld [vmem:[%s3 + $0x2f0] sm:$0xff]
        %v686 = vld [vmem:[%s3 + $0x2f8] sm:$0xff]
        %v687 = vld [vmem:[%s3 + $0x300] sm:$0xff]
        %v688 = vld [vmem:[%s3 + $0x308] sm:$0xff]
        %v689 = vld [vmem:[%s3 + $0x310] sm:$0xff]
        %v690 = vld [vmem:[%s3 + $0x318] sm:$0xff]
        %v691 = vld [vmem:[%s3 + $0x320] sm:$0xff]
        %v692 = vld [vmem:[%s3 + $0x328] sm:$0x1]
        %v693 = vld [vmem:[%s3 + $0x330] sm:$0xff]
        %v694 = vld [vmem:[%s3 + $0x338] sm:$0xff]
        %v695 = vld [vmem:[%s3 + $0x340] sm:$0xff]
        %v696 = vld [vmem:[%s3 + $0x348] sm:$0xff]
        %v697 = vld [vmem:[%s3 + $0x350] sm:$0xff]
        %v698 = vld [vmem:[%s3 + $0x358] sm:$0xff]
        %v699 = vld [vmem:[%s3 + $0x360] sm:$0xff]
        %v700 = vld [vmem:[%s3 + $0x368] sm:$0xff]
        %v701 = vperm.slane %v650, 0
        %v703 = vsel %vm245, %v645, 0
        %705 = vmatpush.msra.mxu0 0.0
        %706 = vmatpush.msra.mxu0 0.0
        %707 = vmatpush.msra.mxu0 0.0
        %708 = vmatpush.msra.mxu0 0.0
        %709 = vmatpush.msra.mxu0 0.0
        %710 = vmatpush.msra.mxu0 0.0
        %711 = vmatpush.msra.mxu0 0.0
        %712 = vmatpush.msra.mxu0 0.0
        %713 = vmatpush.msra.mxu0 0.0
        %714 = vmatpush.msra.mxu0 0.0
        %715 = vmatpush.msra.mxu0 0.0
        %716 = vmatpush.msra.mxu0 0.0
        %717 = vmatpush.msra.mxu0 %v649
        %718 = vmatpush.msra.mxu0 %v648
        %719 = vmatpush.msra.mxu0 %v647
        %720 = vmatpush.msra.mxu0 %v646
        %721 = vmatmul.f32.gmra.mxu0 %v703
        %v722 = vpop.f32.mrf.mxu0
        %v723 = vadd.f32 %v701, %v722
        %724 = vdwg.mxu0
        %726 = vrot.lane.b32.xlu0 %v723, 96
        %v727 = vpop.permute.xlu0 %726
        %v728 = vsel %vm272, %v723, 0
        %v730 = vsel %vm272, %v727, 0
        %732 = vmatpush.xpose.msra.mxu0 0.0
        %733 = vmatpush.xpose.msra.mxu0 0.0
        %734 = vmatpush.xpose.msra.mxu0 0.0
        %735 = vmatpush.xpose.msra.mxu0 0.0
        %736 = vmatpush.xpose.msra.mxu0 0.0
        %737 = vmatpush.xpose.msra.mxu0 0.0
        %738 = vmatpush.xpose.msra.mxu0 0.0
        %739 = vmatpush.xpose.msra.mxu0 0.0
        %740 = vmatpush.xpose.msra.mxu0 0.0
        %741 = vmatpush.xpose.msra.mxu0 0.0
        %742 = vmatpush.xpose.msra.mxu0 0.0
        %743 = vmatpush.xpose.msra.mxu0 0.0
        %744 = vmatpush.xpose.msra.mxu0 0.0
        %745 = vmatpush.xpose.msra.mxu0 0.0
        %746 = vmatpush.xpose.msra.mxu0 0.0
        %747 = vmatpush.xpose.msra.mxu0 %v730
        %748 = vmatmul.f32.gmra.mxu0 %v728
        %v749 = vpop.f32.mrf.mxu0
        %v750 = vadd.f32 0.0, %v749
        %751 = vdwg.mxu0
        %v752 = vmul.f32 %v750, 0.25
        %v753 = vadd.f32 %v752, %v188
        %v754 = vsel %vm299, %v753, -inf
        %755 = vmax.xlane.f32.xlu0 %v754
        %v756 = vpop.xlane.xlu0 %755
        %v757 = vsub.f32 %v753, %v756
        %v758 = vmul.f32 %v757, 1.442695
        %v759 = vpow.pop %v758
        %v760 = vsel %vm299, %v759, 0.0
        %761 = vadd.xlane.f32.xlu0 %v760
        %v762 = vpop.xlane.xlu0 %761
        %v763 = vrcp.pop %v762
        %v764 = vmul.f32 %v759, %v763
        %765 = vrot.lane.b32.xlu0 %v723, 64
        %v766 = vpop.permute.xlu0 %765
        %v769 = vsel %vm299, %v764, 0
        %771 = vmatpush.msra.mxu0 0.0
        %772 = vmatpush.msra.mxu0 0.0
        %773 = vmatpush.msra.mxu0 0.0
        %774 = vmatpush.msra.mxu0 0.0
        %775 = vmatpush.msra.mxu0 0.0
        %776 = vmatpush.msra.mxu0 0.0
        %777 = vmatpush.msra.mxu0 0.0
        %778 = vmatpush.msra.mxu0 0.0
        %779 = vmatpush.msra.mxu0 0.0
        %780 = vmatpush.msra.mxu0 0.0
        %781 = vmatpush.msra.mxu0 0.0
        %782 = vmatpush.msra.mxu0 0.0
        %783 = vmatpush.msra.mxu0 0.0
        %784 = vmatpush.msra.mxu0 0.0
        %785 = vmatpush.msra.mxu0 0.0
        %786 = vmatpush.msra.mxu0 %v766
        %787 = vmatmul.f32.gmra.mxu0 %v769
        %v788 = vpop.f32.mrf.mxu0
        %v789 = vadd.f32 0.0, %v788
        %790 = vdwg.mxu0
        %791 = vrot.lane.b32.xlu0 %v723, 112
        %v792 = vpop.permute.xlu0 %791
        %793 = vrot.lane.b32.xlu0 %v723, 80
        %v794 = vpop.permute.xlu0 %793
        %v795 = vsel %vm272, %v792, 0
        %v797 = vsel %vm272, %v794, 0
        %799 = vmatpush.xpose.msra.mxu0 0.0
        %800 = vmatpush.xpose.msra.mxu0 0.0
        %801 = vmatpush.xpose.msra.mxu0 0.0
        %802 = vmatpush.xpose.msra.mxu0 0.0
        %803 = vmatpush.xpose.msra.mxu0 0.0
        %804 = vmatpush.xpose.msra.mxu0 0.0
        %805 = vmatpush.xpose.msra.mxu0 0.0
        %806 = vmatpush.xpose.msra.mxu0 0.0
        %807 = vmatpush.xpose.msra.mxu0 0.0
        %808 = vmatpush.xpose.msra.mxu0 0.0
        %809 = vmatpush.xpose.msra.mxu0 0.0
        %810 = vmatpush.xpose.msra.mxu0 0.0
        %811 = vmatpush.xpose.msra.mxu0 0.0
        %812 = vmatpush.xpose.msra.mxu0 0.0
        %813 = vmatpush.xpose.msra.mxu0 0.0
        %814 = vmatpush.xpose.msra.mxu0 %v797
        %815 = vmatmul.f32.gmra.mxu0 %v795
        %v816 = vpop.f32.mrf.mxu0
        %v817 = vadd.f32 0.0, %v816
        %818 = vdwg.mxu0
        %v819 = vmul.f32 %v817, 0.25
        %v820 = vadd.f32 %v819, %v188
        %v821 = vsel %vm299, %v820, -inf
        %822 = vmax.xlane.f32.xlu0 %v821
        %v823 = vpop.xlane.xlu0 %822
        %v824 = vsub.f32 %v820, %v823
        %v825 = vmul.f32 %v824, 1.442695
        %v826 = vpow.pop %v825
        %v827 = vsel %vm299, %v826, 0.0
        %828 = vadd.xlane.f32.xlu0 %v827
        %v829 = vpop.xlane.xlu0 %828
        %v830 = vrcp.pop %v829
        %v831 = vmul.f32 %v826, %v830
        %832 = vrot.lane.b32.xlu0 %v723, 48
        %v833 = vpop.permute.xlu0 %832
        %v836 = vsel %vm299, %v831, 0
        %838 = vmatpush.msra.mxu0 0.0
        %839 = vmatpush.msra.mxu0 0.0
        %840 = vmatpush.msra.mxu0 0.0
        %841 = vmatpush.msra.mxu0 0.0
        %842 = vmatpush.msra.mxu0 0.0
        %843 = vmatpush.msra.mxu0 0.0
        %844 = vmatpush.msra.mxu0 0.0
        %845 = vmatpush.msra.mxu0 0.0
        %846 = vmatpush.msra.mxu0 0.0
        %847 = vmatpush.msra.mxu0 0.0
        %848 = vmatpush.msra.mxu0 0.0
        %849 = vmatpush.msra.mxu0 0.0
        %850 = vmatpush.msra.mxu0 0.0
        %851 = vmatpush.msra.mxu0 0.0
        %852 = vmatpush.msra.mxu0 0.0
        %853 = vmatpush.msra.mxu0 %v833
        %854 = vmatmul.f32.gmra.mxu0 %v836
        %v855 = vpop.f32.mrf.mxu0
        %v856 = vadd.f32 0.0, %v855
        %857 = vdwg.mxu0
        %859 = vrot.lane.b32.xlu0 %v856, 16
        %v860 = vpop.permute.xlu0 %859
        %v862 = vsel %vm272, %v789, %v860
        %v863 = vperm.slane %v655, 0
        %v865 = vsel %vm245, %v862, 0
        %867 = vmatpush.msra.mxu0 0.0
        %868 = vmatpush.msra.mxu0 0.0
        %869 = vmatpush.msra.mxu0 0.0
        %870 = vmatpush.msra.mxu0 0.0
        %871 = vmatpush.msra.mxu0 0.0
        %872 = vmatpush.msra.mxu0 0.0
        %873 = vmatpush.msra.mxu0 0.0
        %874 = vmatpush.msra.mxu0 0.0
        %875 = vmatpush.msra.mxu0 0.0
        %876 = vmatpush.msra.mxu0 0.0
        %877 = vmatpush.msra.mxu0 0.0
        %878 = vmatpush.msra.mxu0 0.0
        %879 = vmatpush.msra.mxu0 %v654
        %880 = vmatpush.msra.mxu0 %v653
        %881 = vmatpush.msra.mxu0 %v652
        %882 = vmatpush.msra.mxu0 %v651
        %883 = vmatmul.f32.gmra.mxu0 %v865
        %v884 = vpop.f32.mrf.mxu0
        %v885 = vadd.f32 %v863, %v884
        %886 = vdwg.mxu0
        %v887 = vadd.f32 %v885, %v645
        %v888 = vsel %vm245, %v887, 0.0
        %889 = vadd.xlane.f32.xlu0 %v888
        %v890 = vpop.xlane.xlu0 %889
        %v891 = vmul.f32 %v890, %v443
        %v892 = vsub.f32 %v887, %v891
        %v893 = vmul.f32 %v892, %v892
        %v894 = vsel %vm245, %v893, 0.0
        %895 = vadd.xlane.f32.xlu0 %v894
        %v896 = vpop.xlane.xlu0 %895
        %v897 = vmul.f32 %v896, %v443
        %v898 = vadd.f32 %v897, 1e-05
        %v899 = vrsqrt.pop %v898
        %v900 = vmul.f32 %v899, %v898
        %v901 = vmul.f32 %v900, %v899
        %v902 = vmul.f32 0.5, %v901
        %v903 = vsub.f32 1.5, %v902
        %v904 = vmul.f32 %v899, %v903
        %vm905 = vweird.f32 %v898
        %vm906 = vweird.f32 %v899
        %vm907 = vmor %vm905, %vm906
        %v908 = vsel %vm907, %v899, %v904
        %v909 = vmul.f32 %v892, %v908
        %v910 = vperm.slane %v655, 1
        %v911 = vmul.f32 %v909, %v910
        %v912 = vperm.slane %v655, 2
        %v913 = vadd.f32 %v911, %v912
        %v914 = vmul.f32 %v913, %v184
        %v916 = vrot.slane %v914, 4
        %v918 = vsel %vm471, 0.0, %v916
        %v919 = vsel %vm471, %v916, 0.0
        %v922 = vrot.slane %v918, 1
        %v923 = vrot.slane %v919, 1
        %v924 = vsel %vm476, %v922, %v923
        %925 = vrot.lane.b32.xlu0 %v924, 32
        %v926 = vpop.permute.xlu0 %925
        %v928 = vrot.slane %v918, 2
        %v929 = vrot.slane %v919, 2
        %v930 = vsel %vm483, %v928, %v929
        %931 = vrot.lane.b32.xlu0 %v930, 64
        %v932 = vpop.permute.xlu0 %931
        %v934 = vrot.slane %v918, 3
        %v935 = vrot.slane %v919, 3
        %v936 = vsel %vm490, %v934, %v935
        %937 = vrot.lane.b32.xlu0 %v936, 96
        %v938 = vpop.permute.xlu0 %937
        %v940 = vrot.slane %v918, 4
        %v941 = vrot.slane %v919, 4
        %v942 = vsel %vm471, %v940, %v941
        %v944 = vrot.slane %v918, 5
        %v945 = vrot.slane %v919, 5
        %v946 = vsel %vm501, %v944, %v945
        %947 = vrot.lane.b32.xlu0 %v946, 32
        %v948 = vpop.permute.xlu0 %947
        %v950 = vrot.slane %v918, 6
        %v951 = vrot.slane %v919, 6
        %v952 = vsel %vm508, %v950, %v951
        %953 = vrot.lane.b32.xlu0 %v952, 64
        %v954 = vpop.permute.xlu0 %953
        %v956 = vrot.slane %v918, 7
        %v957 = vrot.slane %v919, 7
        %v958 = vsel %vm515, %v956, %v957
        %959 = vrot.lane.b32.xlu0 %v958, 96
        %v960 = vpop.permute.xlu0 %959
        %v962 = vsel %vm245, %v918, %v926
        %v963 = vsel %vm523, %v962, %v932
        %v964 = vsel %vm525, %v963, %v938
        %v965 = vsel %vm245, %v942, %v948
        %v966 = vsel %vm523, %v965, %v954
        %v967 = vsel %vm525, %v966, %v960
        %v968 = vperm.slane %v692, 0
        %v969 = vsel %vm245, %v919, 0
        %971 = vmatpush.msra.mxu0 %v671
        %972 = vmatpush.msra.mxu0 %v670
        %973 = vmatpush.msra.mxu0 %v669
        %974 = vmatpush.msra.mxu0 %v668
        %975 = vmatpush.msra.mxu0 %v667
        %976 = vmatpush.msra.mxu0 %v666
        %977 = vmatpush.msra.mxu0 %v665
        %978 = vmatpush.msra.mxu0 %v664
        %979 = vmatpush.msra.mxu0 %v663
        %980 = vmatpush.msra.mxu0 %v662
        %981 = vmatpush.msra.mxu0 %v661
        %982 = vmatpush.msra.mxu0 %v660
        %983 = vmatpush.msra.mxu0 %v659
        %984 = vmatpush.msra.mxu0 %v658
        %985 = vmatpush.msra.mxu0 %v657
        %986 = vmatpush.msra.mxu0 %v656
        %987 = vmatmul.f32.gmra.mxu0 %v964
        %v988 = vpop.f32.mrf.mxu0
        %v989 = vadd.f32 %v968, %v988
        %990 = vdwg.mxu0
        %991 = vmatpush.msra.mxu0 %v687
        %992 = vmatpush.msra.mxu0 %v686
        %993 = vmatpush.msra.mxu0 %v685
        %994 = vmatpush.msra.mxu0 %v684
        %995 = vmatpush.msra.mxu0 %v683
        %996 = vmatpush.msra.mxu0 %v682
        %997 = vmatpush.msra.mxu0 %v681
        %998 = vmatpush.msra.mxu0 %v680
        %999 = vmatpush.msra.mxu0 %v679
        %1000 = vmatpush.msra.mxu0 %v678
        %1001 = vmatpush.msra.mxu0 %v677
        %1002 = vmatpush.msra.mxu0 %v676
        %1003 = vmatpush.msra.mxu0 %v675
        %1004 = vmatpush.msra.mxu0 %v674
        %1005 = vmatpush.msra.mxu0 %v673
        %1006 = vmatpush.msra.mxu0 %v672
        %1007 = vmatmul.f32.gmra.mxu0 %v967
        %v1008 = vpop.f32.mrf.mxu0
        %v1009 = vadd.f32 %v989, %v1008
        %1010 = vdwg.mxu0
        %1011 = vmatpush.msra.mxu0 0.0
        %1012 = vmatpush.msra.mxu0 0.0
        %1013 = vmatpush.msra.mxu0 0.0
        %1014 = vmatpush.msra.mxu0 0.0
        %1015 = vmatpush.msra.mxu0 0.0
        %1016 = vmatpush.msra.mxu0 0.0
        %1017 = vmatpush.msra.mxu0 0.0
        %1018 = vmatpush.msra.mxu0 0.0
        %1019 = vmatpush.msra.mxu0 0.0
        %1020 = vmatpush.msra.mxu0 0.0
        %1021 = vmatpush.msra.mxu0 0.0
        %1022 = vmatpush.msra.mxu0 0.0
        %1023 = vmatpush.msra.mxu0 %v691
        %1024 = vmatpush.msra.mxu0 %v690
        %1025 = vmatpush.msra.mxu0 %v689
        %1026 = vmatpush.msra.mxu0 %v688
        %1027 = vmatmul.f32.gmra.mxu0 %v969
        %v1028 = vpop.f32.mrf.mxu0
        %v1029 = vadd.f32 %v1009, %v1028
        %1030 = vdwg.mxu0
        %v1031 = vmax.f32 %v1029, 0.0
        %v1032 = vperm.slane %v655, 3
        %v1034 = vsel %vm523, %v1031, 0
        %1036 = vmatpush.msra.mxu0 0.0
        %1037 = vmatpush.msra.mxu0 0.0
        %1038 = vmatpush.msra.mxu0 0.0
        %1039 = vmatpush.msra.mxu0 0.0
        %1040 = vmatpush.msra.mxu0 0.0
        %1041 = vmatpush.msra.mxu0 0.0
        %1042 = vmatpush.msra.mxu0 0.0
        %1043 = vmatpush.msra.mxu0 0.0
        %1044 = vmatpush.msra.mxu0 %v700
        %1045 = vmatpush.msra.mxu0 %v699
        %1046 = vmatpush.msra.mxu0 %v698
        %1047 = vmatpush.msra.mxu0 %v697
        %1048 = vmatpush.msra.mxu0 %v696
        %1049 = vmatpush.msra.mxu0 %v695
        %1050 = vmatpush.msra.mxu0 %v694
        %1051 = vmatpush.msra.mxu0 %v693
        %1052 = vmatmul.f32.gmra.mxu0 %v1034
        %v1053 = vpop.f32.mrf.mxu0
        %v1054 = vadd.f32 %v1032, %v1053
        %1055 = vdwg.mxu0
        %v1056 = vadd.f32 %v1054, %v914
        %v1057 = vsel %vm245, %v1056, 0.0
        %1058 = vadd.xlane.f32.xlu0 %v1057
        %v1059 = vpop.xlane.xlu0 %1058
        %v1060 = vmul.f32 %v1059, %v443
        %v1061 = vsub.f32 %v1056, %v1060
        %v1062 = vmul.f32 %v1061, %v1061
        %v1063 = vsel %vm245, %v1062, 0.0
        %1064 = vadd.xlane.f32.xlu0 %v1063
        %v1065 = vpop.xlane.xlu0 %1064
        %v1066 = vmul.f32 %v1065, %v443
        %v1067 = vadd.f32 %v1066, 1e-05
        %v1068 = vrsqrt.pop %v1067
        %v1069 = vmul.f32 %v1068, %v1067
        %v1070 = vmul.f32 %v1069, %v1068
        %v1071 = vmul.f32 0.5, %v1070
        %v1072 = vsub.f32 1.5, %v1071
        %v1073 = vmul.f32 %v1068, %v1072
        %vm1074 = vweird.f32 %v1067
        %vm1075 = vweird.f32 %v1068
        %vm1076 = vmor %vm1074, %vm1075
        %v1077 = vsel %vm1076, %v1068, %v1073
        %v1078 = vmul.f32 %v1061, %v1077
        %v1079 = vperm.slane %v655, 4
        %v1080 = vmul.f32 %v1078, %v1079
        %v1081 = vperm.slane %v655, 5
        %v1082 = vadd.f32 %v1080, %v1081
        %v1083 = vmul.f32 %v1082, %v184
        %1084 = vst.msk [vmem:[%s170] sm:$0xff] %vm245, %v1083
        %s1085 = sand.u32 %s102, 1
        %s1086 = scalar_lea.sflag [#allocation5], %s1085
        %s1087 = sand.u32 %s102, 1
        %s1088 = smul.addr %s1087, 8
        %s1089 = scalar_lea.vmem [#allocation4], %s1088
        // Predicated region
        $region33: #{tpu_custom_call.1} parent=31 // pred_check
          %p1090 = pneg %p112
        $region34: #{tpu_custom_call.1} parent=31 // pred_check_branch
          %1092 = sbr.rel (%p1090) target = $region36
        $region35: #{tpu_custom_call.1} parent=31 // pred_region
          %1094 = vsyncadd %s1086, 0
          %s1095 = smul.addr %s26, 8
          %s1096 = scalar_lea.hbm %s4, %s1095
          %s1098 = sshll.u32 %s1089, 4
          %s1099 = int_to_ptr.vmem [resolvable:$true] %s1098
          %s1100 = sshll.u32 %s1096, 4
          %s1101 = int_to_ptr.hbm [resolvable:$true] %s1100
          %1103 = dma.vmem_to_hbm [thread:$0]  %s1099, 128, %s1101, %s1086
        $region36: #{tpu_custom_call.1} parent=31 // pred_fallthru
          _
      $region32: #{tpu_custom_call.1} parent=5 // pred_fallthru
        _
      %p1104 = scmp.le.s32.totalorder 2, %s21
      // Predicated region
      $region37: #{tpu_custom_call.1} parent=5 // pred_check
        %p1105 = pneg %p1104
      $region38: #{tpu_custom_call.1} parent=5 // pred_check_branch
        %1107 = sbr.rel (%p1105) target = $region40
      $region39: #{tpu_custom_call.1} parent=5 // pred_region
        %s1108 = ssub.s32 %s21, 2
        // Predicated region
        $region41: #{tpu_custom_call.1} parent=39 // pred_check
          %p1109 = pneg %p118
        $region42: #{tpu_custom_call.1} parent=39 // pred_check_branch
          %1111 = sbr.rel (%p1109) target = $region44
        $region43: #{tpu_custom_call.1} parent=39 // pred_region
          %s1112 = sand.u32 %s103, 1
          %s1113 = scalar_lea.sflag [#allocation5], %s1112
          %s1114 = sand.u32 %s103, 1
          %s1115 = smul.addr %s1114, 8
          %s1116 = scalar_lea.vmem [#allocation4], %s1115
          %1118 = dma.done %s1113, 128
        $region44: #{tpu_custom_call.1} parent=39 // pred_fallthru
          _
      $region40: #{tpu_custom_call.1} parent=5 // pred_fallthru
        _
    $region6: #{tpu_custom_call.1} parent=1 // loop_footer
      %s25 = sadd.s32 1, %s21
    $region7: #{tpu_custom_call.1} parent=1 // loop_footer_branch
      %20 = sbr.rel target = $region3
    $region8: #{tpu_custom_call.1} parent=1 // loop_exit
      _
    %1119 = vsyncpa [#allocation5], 1
    %s1120 = scalar_lea.sflag [#allocation5], 1
    %1121 = vsyncpa %s1120, 1

</llo_original>
